<compile_context>
chip_gen: v5e
topology: v5e:2x2
jax: 0.10.0
libtpu: 0.0.40
codegen_flags: <defaults>
</compile_context>

<pallas_src>
import functools

import jax
import jax.numpy as jnp
from jax.experimental import pallas as pl
from jax.experimental.pallas import tpu as pltpu


# --------------------------------------------------------------------------------------
# Kernel
# --------------------------------------------------------------------------------------
def _graph_reasoning_kernel(a_ref, b_ref, c_ref,
                            w_a1f_ref, w_a2e_ref,
                            bd_b1_ref, lmat_b_ref, w_b2_ref,
                            bd_c1_ref, lmat_c_ref, w_c2_ref,
                            w_r1_ref, w_r2_ref,
                            out_ref):
    f32 = jnp.float32
    a = a_ref[0]                      # [va_in, TN]      f32
    xb = b_ref[0]                     # [P0*vb_in, TN]   bf16
    xc = c_ref[0]                     # [P1*vc_in, TN]   bf16
    va_out = w_a2e_ref.shape[1]
    vb_out = w_b2_ref.shape[0]
    vc_out = w_c2_ref.shape[0]
    P0 = lmat_b_ref.shape[0]
    P1 = lmat_c_ref.shape[0]

    # ---- vert_a path: fused (va_embedding conv1 | gate_b conv | gate_c conv) ----
    pre_a = jnp.dot(w_a1f_ref[...], a, preferred_element_type=f32)        # [3*va_out, TN]
    h_a = jax.nn.relu(pre_a[:va_out])
    gate_b = 1.0 - jax.nn.sigmoid(pre_a[va_out:2 * va_out])
    gate_c = 1.0 - jax.nn.sigmoid(pre_a[2 * va_out:])
    # fused (va_embedding conv2 | reweight_ab a-logit | reweight_ac a-logit)
    ea_ext = jnp.dot(w_a2e_ref[...], h_a, preferred_element_type=f32)     # [va_out+2, TN]
    emb_a = ea_ext[:va_out]                                               # [va_out, TN]
    la_b = ea_ext[va_out:va_out + 1]                                      # [1, TN]
    la_c = ea_ext[va_out + 1:va_out + 2]                                  # [1, TN]

    def _aggregate(x, bd1_ref, lmat_ref, w2_ref, P, v_out, la, gate):
        # hidden layer for all P patches at once (block-diagonal weights, sublane-folded)
        hid = jax.nn.relu(jnp.dot(bd1_ref[...], x, preferred_element_type=f32))   # [P*v_out,TN]
        # reweight logits: one row per patch (uses the folded (w2 @ w_ab) weight row)
        logit = jax.nn.relu(
            la + jnp.dot(lmat_ref[...], hid, preferred_element_type=f32))         # [P, TN]
        m = jnp.max(logit, axis=0, keepdims=True)
        e = jnp.exp(logit - m)
        inv = pl.reciprocal(jnp.sum(e, axis=0, keepdims=True), approx=True)
        wsm = e * inv                                                              # [P, TN]
        # weighted sum over patches BEFORE the 2nd embedding matmul:
        #   sum_p w_p * (W2 @ h_p) == W2 @ (sum_p w_p * h_p)
        hid3 = hid.reshape(P, v_out, hid.shape[-1])                # 8-row aligned split (free)
        hidw = jnp.sum(hid3 * wsm[:, None, :], axis=0)                             # [v_out, TN]
        agg = jnp.dot(w2_ref[...], hidw, preferred_element_type=f32)               # [v_out, TN]
        return agg * gate

    agg_b = _aggregate(xb, bd_b1_ref, lmat_b_ref, w_b2_ref, P0, vb_out, la_b, gate_b)
    agg_c = _aggregate(xc, bd_c1_ref, lmat_c_ref, w_c2_ref, P1, vc_out, la_c, gate_c)

    # ---- reproject: single sublane concat (3*va_out rows) + single K=3*va_out matmul ----
    abc = jax.nn.sigmoid(jnp.concatenate([agg_b, agg_c, emb_a], axis=0))   # [vb+vc+va_out, TN]
    pre = jax.nn.relu(jnp.dot(w_r1_ref[...], abc, preferred_element_type=f32))     # [va_in, TN]
    out = jnp.dot(w_r2_ref[...], pre, preferred_element_type=f32)                  # [va_in, TN]
    out_ref[0] = out.astype(out_ref.dtype)


# --------------------------------------------------------------------------------------
# Wrapper helpers
# --------------------------------------------------------------------------------------
def _unfold_fold_cf(x, r, dtype):
    """nn.Unfold(kernel=r, stride=r) with the patch axis folded into channels:
    [B, C, H, W] -> [B, r*r*C, Ho*Wo], row index p*C + c with p = i*r + j."""
    B, C, H, W = x.shape
    Ho, Wo = H // r, W // r
    x = x.reshape(B, C, Ho, r, Wo, r)
    x = jnp.transpose(x, (0, 3, 5, 1, 2, 4))          # [B, r, r, C, Ho, Wo]
    return x.reshape(B, r * r * C, Ho * Wo).astype(dtype)


def _round_up(x, m):
    return -(-x // m) * m


def _vmem_capacity_bytes():
    try:
        return int(pltpu.get_tpu_info().vmem_capacity_bytes)
    except Exception:
        return 64 * 1024 * 1024        # conservative (v7x-sized) fallback


def _pick_tile_n(N, B, io_bytes_per_px, tmp_bytes_per_px, budget_bytes):
    """Largest multiple-of-128 divisor of N whose double-buffered DMA blocks plus in-kernel
    f32 temporaries fit the budget.  Keeps >= 2 N-steps when B == 1 (megacore sharding)."""
    if N % 128 != 0:
        return N                        # full-extent last dim satisfies (8,128)-or-full rule
    max_tn = N if (B >= 2 or N == 128) else N // 2
    best = 128
    for t in range(128, max_tn + 1, 128):
        if N % t == 0 and t * (2 * io_bytes_per_px + tmp_bytes_per_px) <= budget_bytes:
            best = t
    return best


# --------------------------------------------------------------------------------------
# Forward wrapper
# --------------------------------------------------------------------------------------
def graph_reasoning_forward(vert_a, vert_b, vert_c, params, spatial_ratio):
    (wa1, wa2, wgb, wgc, wb1, wb2, wc1, wc2,
     wab_a, wab_b, wac_a, wac_c, wr1, wr2) = params
    B, va_in, Ha, Wa = vert_a.shape
    r0, r1 = spatial_ratio
    N = Ha * Wa
    P0, P1 = r0 * r0, r1 * r1
    va_out = wa1.shape[1]
    vb_in, vb_out = wb1.shape
    vc_in, vc_out = wc1.shape
    assert vb_out == va_out and vc_out == va_out, (
        "gating requires vb_out == vc_out == va_out (as in the PyTorch module)")

    f32, bf16 = jnp.float32, jnp.bfloat16
    # channels-first flattened a (free reshape) stays f32; b/c are unfolded with the patch
    # axis folded into channels and cast to bf16 in the same pass (halves their HBM bytes).
    a_cf = vert_a.reshape(B, va_in, N).astype(f32)
    b_fold = _unfold_fold_cf(vert_b, r0, bf16)            # [B, P0*vb_in, N]
    c_fold = _unfold_fold_cf(vert_c, r1, bf16)            # [B, P1*vc_in, N]

    # ---- weight prep: [out,in] layout, tiny-matmul fusions, block-diag patch fold ----
    w_a1f = jnp.concatenate([wa1.T, wgb.T, wgc.T], axis=0).astype(f32)        # [3*va_out, va_in]
    w_a2e = jnp.concatenate(
        [wa2.T, (wa2 @ wab_a).T, (wa2 @ wac_a).T], axis=0).astype(f32)        # [va_out+2, va_out]
    eye0 = jnp.eye(P0, dtype=f32)
    eye1 = jnp.eye(P1, dtype=f32)
    bd_b1 = jnp.kron(eye0, wb1.T.astype(f32)).astype(bf16)        # [P0*vb_out, P0*vb_in]
    bd_c1 = jnp.kron(eye1, wc1.T.astype(f32)).astype(bf16)        # [P1*vc_out, P1*vc_in]
    lmat_b = jnp.kron(eye0, (wb2 @ wab_b).T.astype(f32))          # [P0, P0*vb_out]
    lmat_c = jnp.kron(eye1, (wc2 @ wac_c).T.astype(f32))          # [P1, P1*vc_out]
    w_b2t = wb2.T.astype(f32)
    w_c2t = wc2.T.astype(f32)
    w_r1t = wr1.T.astype(f32)                                     # [va_in, vb+vc+va_out]
    w_r2t = wr2.T.astype(f32)                                     # [va_in, va_in]
    weights = (w_a1f, w_a2e, bd_b1, lmat_b, w_b2t, bd_c1, lmat_c, w_c2t, w_r1t, w_r2t)

    # ---- VMEM-aware tile choice: DMA blocks (sublane-padded) + in-kernel f32 temps ----
    io_px = (_round_up(va_in, 8) * 4            # a   (f32)
             + _round_up(P0 * vb_in, 16) * 2    # b   (bf16, 16-row sublane tile)
             + _round_up(P1 * vc_in, 16) * 2    # c   (bf16)
             + _round_up(va_in, 8) * 4)         # out (f32)
    tmp_px = 4 * (2 * (_round_up(P0 * vb_out, 8) + _round_up(P1 * vc_out, 8))  # hid (+copies)
                  + 4 * _round_up(va_out, 8)          # pre_a slices, emb_a, gates
                  + 3 * (P0 + P1)                     # logits / exp / softmax weights
                  + 2 * (vb_out + vc_out)             # hidw, agg
                  + 4 * va_out + 8)                   # abc, pre, out
    vmem_cap = _vmem_capacity_bytes()
    tn = _pick_tile_n(N, B, io_px, tmp_px, budget_bytes=vmem_cap // 3)
    grid = (B, N // tn)

    def _wspec(w):
        # Weights total a few KiB, so default double buffering is harmless; pl.Buffered(1)
        # would only matter if VMEM got tight after enlarging TILE_N.
        return pl.BlockSpec(w.shape, lambda b, n: (0, 0))

    out = pl.pallas_call(
        _graph_reasoning_kernel,
        out_shape=jax.ShapeDtypeStruct((B, va_in, N), jnp.float32),
        grid_spec=pltpu.PrefetchScalarGridSpec(
            num_scalar_prefetch=0,
            grid=grid,
            in_specs=[
                pl.BlockSpec((1, va_in, tn), lambda b, n: (b, 0, n)),
                pl.BlockSpec((1, P0 * vb_in, tn), lambda b, n: (b, 0, n)),
                pl.BlockSpec((1, P1 * vc_in, tn), lambda b, n: (b, 0, n)),
            ] + [_wspec(w) for w in weights],
            out_specs=pl.BlockSpec((1, va_in, tn), lambda b, n: (b, 0, n)),
        ),
        compiler_params=pltpu.CompilerParams(
            dimension_semantics=("parallel", "parallel"),
            vmem_limit_bytes=int(vmem_cap * 3 // 4),
        ),
    )(a_cf, b_fold, c_fold, *weights)

    # channels-first output -> NCHW is a free reshape (no transpose)
    return out.reshape(B, va_in, Ha, Wa)


# --------------------------------------------------------------------------------------
# Plain-JAX reference (mirrors the PyTorch forward, vectorized over j) + param init
# --------------------------------------------------------------------------------------
def _unfold_patches_cl(x, r):
    B, C, H, W = x.shape
    Ho, Wo = H // r, W // r
    x = x.reshape(B, C, Ho, r, Wo, r)
    x = jnp.transpose(x, (0, 3, 5, 2, 4, 1))          # [B, r, r, Ho, Wo, C]
    return x.reshape(B, r * r, Ho * Wo, C)


def graph_reasoning_reference(vert_a, vert_b, vert_c, params, spatial_ratio):
    (wa1, wa2, wgb, wgc, wb1, wb2, wc1, wc2,
     wab_a, wab_b, wac_a, wac_c, wr1, wr2) = params
    B, va_in, Ha, Wa = vert_a.shape
    r0, r1 = spatial_ratio
    N = Ha * Wa
    a = jnp.transpose(vert_a.reshape(B, va_in, N), (0, 2, 1))            # [B, N, va_in]
    emb_a = jax.nn.relu(a @ wa1) @ wa2                                   # [B, N, va_out]
    gate_b = 1.0 - jax.nn.sigmoid(a @ wgb)
    gate_c = 1.0 - jax.nn.sigmoid(a @ wgc)
    bpat = _unfold_patches_cl(vert_b, r0)                                # [B, P0, N, vb_in]
    cpat = _unfold_patches_cl(vert_c, r1)
    emb_b = jax.nn.relu(bpat @ wb1) @ wb2                                # [B, P0, N, vb_out]
    emb_c = jax.nn.relu(cpat @ wc1) @ wc2
    lg_b = jax.nn.relu((emb_a @ wab_a)[:, None, :, 0] + (emb_b @ wab_b)[..., 0])
    wgt_b = jax.nn.softmax(lg_b, axis=1)
    agg_b = jnp.sum(wgt_b[..., None] * emb_b, axis=1) * gate_b           # [B, N, vb_out]
    lg_c = jax.nn.relu((emb_a @ wac_a)[:, None, :, 0] + (emb_c @ wac_c)[..., 0])
    wgt_c = jax.nn.softmax(lg_c, axis=1)
    agg_c = jnp.sum(wgt_c[..., None] * emb_c, axis=1) * gate_c
    abc = jax.nn.sigmoid(jnp.concatenate([agg_b, agg_c, emb_a], axis=-1))
    out = jax.nn.relu(abc @ wr1) @ wr2                                   # [B, N, va_in]
    return jnp.transpose(out, (0, 2, 1)).reshape(B, va_in, Ha, Wa)


def init_params(key, va_in, va_out, vb_in, vb_out, vc_in, vc_out):
    keys = jax.random.split(key, 12)
    s = 0.2
    wa1 = jax.random.normal(keys[0], (va_in, va_out), jnp.float32) * s
    wa2 = jax.random.normal(keys[1], (va_out, va_out), jnp.float32) * s
    wgb = jax.random.normal(keys[2], (va_in, va_out), jnp.float32) * s
    wgc = jax.random.normal(keys[3], (va_in, va_out), jnp.float32) * s
    wb1 = jax.random.normal(keys[4], (vb_in, vb_out), jnp.float32) * s
    wb2 = jax.random.normal(keys[5], (vb_out, vb_out), jnp.float32) * s
    wc1 = jax.random.normal(keys[6], (vc_in, vc_out), jnp.float32) * s
    wc2 = jax.random.normal(keys[7], (vc_out, vc_out), jnp.float32) * s
    wab = jax.random.normal(keys[8], (va_out + vb_out, 1), jnp.float32) * s
    wac = jax.random.normal(keys[9], (va_out + vc_out, 1), jnp.float32) * s
    wr1 = jax.random.normal(keys[10], (vb_out + vc_out + va_out, va_in), jnp.float32) * s
    wr2 = jax.random.normal(keys[11], (va_in, va_in), jnp.float32) * s
    wab_a, wab_b = wab[:va_out], wab[va_out:]
    wac_a, wac_c = wac[:va_out], wac[va_out:]
    return (wa1, wa2, wgb, wgc, wb1, wb2, wc1, wc2,
            wab_a, wab_b, wac_a, wac_c, wr1, wr2)


if __name__ == "__main__":
    B = 2
    va_in, va_out = 4, 8
    vb_in, vb_out = 4, 8          # vb_out must equal va_out (gating multiply)
    vc_in, vc_out = 4, 8          # vc_out must equal va_out
    Ha = Wa = 16                  # N = 256
    spatial_ratio = (2, 4)

    key = jax.random.PRNGKey(0)
    k1, k2, k3, kp = jax.random.split(key, 4)
    vert_a = jax.random.normal(k1, (B, va_in, Ha, Wa), jnp.float32)
    vert_b = jax.random.normal(
        k2, (B, vb_in, Ha * spatial_ratio[0], Wa * spatial_ratio[0]), jnp.float32)
    vert_c = jax.random.normal(
        k3, (B, vc_in, Ha * spatial_ratio[1], Wa * spatial_ratio[1]), jnp.float32)
    params = init_params(kp, va_in, va_out, vb_in, vb_out, vc_in, vc_out)

    fwd = jax.jit(functools.partial(graph_reasoning_forward, spatial_ratio=spatial_ratio))
    out = jax.block_until_ready(fwd(vert_a, vert_b, vert_c, params))

    ref = graph_reasoning_reference(vert_a, vert_b, vert_c, params, spatial_ratio)
    assert out.shape == (B, va_in, Ha, Wa)
    # bf16 DMA on the vert_b / vert_c path + approx reciprocal -> ~0.3% relative error
    assert bool(jnp.allclose(out, ref, atol=1e-2, rtol=1e-2)), "mismatch vs JAX reference"
    print("KERNEL_OK")
</pallas_src>

<mosaic_0001>
module attributes {stable_mosaic.version = 11 : i64} {
  func.func @_graph_reasoning_kernel(%arg0: i32, %arg1: i32, %arg2: memref<1x4x256xf32, #tpu.memory_space<vmem>>, %arg3: memref<1x16x256xbf16, #tpu.memory_space<vmem>>, %arg4: memref<1x64x256xbf16, #tpu.memory_space<vmem>>, %arg5: memref<24x4xf32, #tpu.memory_space<vmem>>, %arg6: memref<10x8xf32, #tpu.memory_space<vmem>>, %arg7: memref<32x16xbf16, #tpu.memory_space<vmem>>, %arg8: memref<4x32xf32, #tpu.memory_space<vmem>>, %arg9: memref<8x8xf32, #tpu.memory_space<vmem>>, %arg10: memref<128x64xbf16, #tpu.memory_space<vmem>>, %arg11: memref<16x128xf32, #tpu.memory_space<vmem>>, %arg12: memref<8x8xf32, #tpu.memory_space<vmem>>, %arg13: memref<4x24xf32, #tpu.memory_space<vmem>>, %arg14: memref<4x4xf32, #tpu.memory_space<vmem>>, %arg15: memref<1x4x256xf32, #tpu.memory_space<vmem>>) attributes {dimension_semantics = [#tpu.dimension_semantics<parallel>, #tpu.dimension_semantics<parallel>], iteration_bounds = array<i64: 2, 1>, scalar_prefetch = 0 : i64, scratch_operands = 0 : i64, tpu.core_type = #tpu.core_type<tc>, window_params = [{transform_indices = @transform_0, window_bounds = array<i64: 1, 4, 256>}, {transform_indices = @transform_1, window_bounds = array<i64: 1, 16, 256>}, {transform_indices = @transform_2, window_bounds = array<i64: 1, 64, 256>}, {pipeline_mode = #tpu.pipeline_mode<synchronous>, transform_indices = @transform_3, window_bounds = array<i64: 24, 4>}, {pipeline_mode = #tpu.pipeline_mode<synchronous>, transform_indices = @transform_4, window_bounds = array<i64: 10, 8>}, {pipeline_mode = #tpu.pipeline_mode<synchronous>, transform_indices = @transform_5, window_bounds = array<i64: 32, 16>}, {pipeline_mode = #tpu.pipeline_mode<synchronous>, transform_indices = @transform_6, window_bounds = array<i64: 4, 32>}, {pipeline_mode = #tpu.pipeline_mode<synchronous>, transform_indices = @transform_7, window_bounds = array<i64: 8, 8>}, {pipeline_mode = #tpu.pipeline_mode<synchronous>, transform_indices = @transform_8, window_bounds = array<i64: 128, 64>}, {pipeline_mode = #tpu.pipeline_mode<synchronous>, transform_indices = @transform_9, window_bounds = array<i64: 16, 128>}, {pipeline_mode = #tpu.pipeline_mode<synchronous>, transform_indices = @transform_10, window_bounds = array<i64: 8, 8>}, {pipeline_mode = #tpu.pipeline_mode<synchronous>, transform_indices = @transform_11, window_bounds = array<i64: 4, 24>}, {pipeline_mode = #tpu.pipeline_mode<synchronous>, transform_indices = @transform_12, window_bounds = array<i64: 4, 4>}, {transform_indices = @transform_13, window_bounds = array<i64: 1, 4, 256>}]} {
    %c0 = arith.constant 0 : index
    %c0_0 = arith.constant 0 : index
    %c0_1 = arith.constant 0 : index
    %0 = vector.load %arg2[%c0, %c0_0, %c0_1] : memref<1x4x256xf32, #tpu.memory_space<vmem>>, vector<1x4x256xf32>
    %1 = vector.shape_cast %0 : vector<1x4x256xf32> to vector<4x256xf32>
    %c0_2 = arith.constant 0 : index
    %c0_3 = arith.constant 0 : index
    %c0_4 = arith.constant 0 : index
    %2 = vector.load %arg3[%c0_2, %c0_3, %c0_4] : memref<1x16x256xbf16, #tpu.memory_space<vmem>>, vector<1x16x256xbf16>
    %3 = vector.shape_cast %2 : vector<1x16x256xbf16> to vector<16x256xbf16>
    %c0_5 = arith.constant 0 : index
    %c0_6 = arith.constant 0 : index
    %c0_7 = arith.constant 0 : index
    %4 = vector.load %arg4[%c0_5, %c0_6, %c0_7] : memref<1x64x256xbf16, #tpu.memory_space<vmem>>, vector<1x64x256xbf16>
    %5 = vector.shape_cast %4 : vector<1x64x256xbf16> to vector<64x256xbf16>
    %c0_8 = arith.constant 0 : index
    %c0_9 = arith.constant 0 : index
    %6 = vector.load %arg5[%c0_8, %c0_9] : memref<24x4xf32, #tpu.memory_space<vmem>>, vector<24x4xf32>
    %cst = arith.constant dense<0.000000e+00> : vector<24x256xf32>
    %7 = tpu.matmul %6, %1, %cst {dimension_numbers = #tpu.dot_dimension_numbers<[1], [0], [0], [1], [0, 0, 1, 1], [], []>} : vector<24x4xf32>, vector<4x256xf32>, vector<24x256xf32> -> vector<24x256xf32>
    %8 = vector.extract_strided_slice %7 {offsets = [0, 0], sizes = [8, 256], strides = [1, 1]} : vector<24x256xf32> to vector<8x256xf32>
    %cst_10 = arith.constant 0.000000e+00 : f32
    %9 = vector.broadcast %cst_10 : f32 to vector<8x256xf32>
    %10 = arith.maximumf %8, %9 : vector<8x256xf32>
    %11 = vector.extract_strided_slice %7 {offsets = [8, 0], sizes = [8, 256], strides = [1, 1]} : vector<24x256xf32> to vector<8x256xf32>
    %12 = arith.negf %11 : vector<8x256xf32>
    %13 = math.exp %12 : vector<8x256xf32>
    %cst_11 = arith.constant 1.000000e+00 : f32
    %14 = vector.broadcast %cst_11 : f32 to vector<8x256xf32>
    %15 = arith.addf %14, %13 : vector<8x256xf32>
    %16 = arith.divf %14, %15 : vector<8x256xf32>
    %cst_12 = arith.constant 1.000000e+00 : f32
    %17 = vector.broadcast %cst_12 : f32 to vector<8x256xf32>
    %18 = arith.subf %17, %16 : vector<8x256xf32>
    %19 = vector.extract_strided_slice %7 {offsets = [16, 0], sizes = [8, 256], strides = [1, 1]} : vector<24x256xf32> to vector<8x256xf32>
    %20 = arith.negf %19 : vector<8x256xf32>
    %21 = math.exp %20 : vector<8x256xf32>
    %cst_13 = arith.constant 1.000000e+00 : f32
    %22 = vector.broadcast %cst_13 : f32 to vector<8x256xf32>
    %23 = arith.addf %22, %21 : vector<8x256xf32>
    %24 = arith.divf %22, %23 : vector<8x256xf32>
    %cst_14 = arith.constant 1.000000e+00 : f32
    %25 = vector.broadcast %cst_14 : f32 to vector<8x256xf32>
    %26 = arith.subf %25, %24 : vector<8x256xf32>
    %c0_15 = arith.constant 0 : index
    %c0_16 = arith.constant 0 : index
    %27 = vector.load %arg6[%c0_15, %c0_16] : memref<10x8xf32, #tpu.memory_space<vmem>>, vector<10x8xf32>
    %cst_17 = arith.constant dense<0.000000e+00> : vector<10x256xf32>
    %28 = tpu.matmul %27, %10, %cst_17 {dimension_numbers = #tpu.dot_dimension_numbers<[1], [0], [0], [1], [0, 0, 1, 1], [], []>} : vector<10x8xf32>, vector<8x256xf32>, vector<10x256xf32> -> vector<10x256xf32>
    %29 = vector.extract_strided_slice %28 {offsets = [0, 0], sizes = [8, 256], strides = [1, 1]} : vector<10x256xf32> to vector<8x256xf32>
    %30 = vector.extract_strided_slice %28 {offsets = [8, 0], sizes = [1, 256], strides = [1, 1]} : vector<10x256xf32> to vector<1x256xf32>
    %31 = vector.extract_strided_slice %28 {offsets = [9, 0], sizes = [1, 256], strides = [1, 1]} : vector<10x256xf32> to vector<1x256xf32>
    %c0_18 = arith.constant 0 : index
    %c0_19 = arith.constant 0 : index
    %32 = vector.load %arg7[%c0_18, %c0_19] : memref<32x16xbf16, #tpu.memory_space<vmem>>, vector<32x16xbf16>
    %cst_20 = arith.constant dense<0.000000e+00> : vector<32x256xf32>
    %33 = tpu.matmul %32, %3, %cst_20 {dimension_numbers = #tpu.dot_dimension_numbers<[1], [0], [0], [1], [0, 0, 1, 1], [], []>} : vector<32x16xbf16>, vector<16x256xbf16>, vector<32x256xf32> -> vector<32x256xf32>
    %cst_21 = arith.constant 0.000000e+00 : f32
    %34 = vector.broadcast %cst_21 : f32 to vector<32x256xf32>
    %35 = arith.maximumf %33, %34 : vector<32x256xf32>
    %c0_22 = arith.constant 0 : index
    %c0_23 = arith.constant 0 : index
    %36 = vector.load %arg8[%c0_22, %c0_23] : memref<4x32xf32, #tpu.memory_space<vmem>>, vector<4x32xf32>
    %cst_24 = arith.constant dense<0.000000e+00> : vector<4x256xf32>
    %37 = tpu.matmul %36, %35, %cst_24 {dimension_numbers = #tpu.dot_dimension_numbers<[1], [0], [0], [1], [0, 0, 1, 1], [], []>} : vector<4x32xf32>, vector<32x256xf32>, vector<4x256xf32> -> vector<4x256xf32>
    %38 = vector.broadcast %30 : vector<1x256xf32> to vector<4x256xf32>
    %39 = arith.addf %38, %37 : vector<4x256xf32>
    %cst_25 = arith.constant 0.000000e+00 : f32
    %40 = vector.broadcast %cst_25 : f32 to vector<4x256xf32>
    %41 = arith.maximumf %39, %40 : vector<4x256xf32>
    %cst_26 = arith.constant dense<0xFF800000> : vector<256xf32>
    %42 = vector.multi_reduction <maximumf>, %41, %cst_26 [0] : vector<4x256xf32> to vector<256xf32>
    %43 = vector.shape_cast %42 : vector<256xf32> to vector<1x256xf32>
    %44 = vector.broadcast %43 : vector<1x256xf32> to vector<4x256xf32>
    %45 = arith.subf %41, %44 : vector<4x256xf32>
    %46 = math.exp %45 : vector<4x256xf32>
    %cst_27 = arith.constant dense<0.000000e+00> : vector<256xf32>
    %47 = vector.multi_reduction <add>, %46, %cst_27 [0] : vector<4x256xf32> to vector<256xf32>
    %48 = vector.shape_cast %47 : vector<256xf32> to vector<1x256xf32>
    %49 = tpu.reciprocal %48 {approx = true} : vector<1x256xf32> -> vector<1x256xf32>
    %50 = vector.broadcast %49 : vector<1x256xf32> to vector<4x256xf32>
    %51 = arith.mulf %46, %50 : vector<4x256xf32>
    %52 = vector.shape_cast %35 : vector<32x256xf32> to vector<4x8x256xf32>
    %53 = vector.shape_cast %51 : vector<4x256xf32> to vector<4x1x256xf32>
    %54 = vector.broadcast %53 : vector<4x1x256xf32> to vector<4x8x256xf32>
    %55 = arith.mulf %52, %54 : vector<4x8x256xf32>
    %cst_28 = arith.constant dense<0.000000e+00> : vector<8x256xf32>
    %56 = vector.multi_reduction <add>, %55, %cst_28 [0] : vector<4x8x256xf32> to vector<8x256xf32>
    %c0_29 = arith.constant 0 : index
    %c0_30 = arith.constant 0 : index
    %57 = vector.load %arg9[%c0_29, %c0_30] : memref<8x8xf32, #tpu.memory_space<vmem>>, vector<8x8xf32>
    %cst_31 = arith.constant dense<0.000000e+00> : vector<8x256xf32>
    %58 = tpu.matmul %57, %56, %cst_31 {dimension_numbers = #tpu.dot_dimension_numbers<[1], [0], [0], [1], [0, 0, 1, 1], [], []>} : vector<8x8xf32>, vector<8x256xf32>, vector<8x256xf32> -> vector<8x256xf32>
    %59 = arith.mulf %58, %18 : vector<8x256xf32>
    %c0_32 = arith.constant 0 : index
    %c0_33 = arith.constant 0 : index
    %60 = vector.load %arg10[%c0_32, %c0_33] : memref<128x64xbf16, #tpu.memory_space<vmem>>, vector<128x64xbf16>
    %cst_34 = arith.constant dense<0.000000e+00> : vector<128x256xf32>
    %61 = tpu.matmul %60, %5, %cst_34 {dimension_numbers = #tpu.dot_dimension_numbers<[1], [0], [0], [1], [0, 0, 1, 1], [], []>} : vector<128x64xbf16>, vector<64x256xbf16>, vector<128x256xf32> -> vector<128x256xf32>
    %cst_35 = arith.constant 0.000000e+00 : f32
    %62 = vector.broadcast %cst_35 : f32 to vector<128x256xf32>
    %63 = arith.maximumf %61, %62 : vector<128x256xf32>
    %c0_36 = arith.constant 0 : index
    %c0_37 = arith.constant 0 : index
    %64 = vector.load %arg11[%c0_36, %c0_37] : memref<16x128xf32, #tpu.memory_space<vmem>>, vector<16x128xf32>
    %cst_38 = arith.constant dense<0.000000e+00> : vector<16x256xf32>
    %65 = tpu.matmul %64, %63, %cst_38 {dimension_numbers = #tpu.dot_dimension_numbers<[1], [0], [0], [1], [0, 0, 1, 1], [], []>} : vector<16x128xf32>, vector<128x256xf32>, vector<16x256xf32> -> vector<16x256xf32>
    %66 = vector.broadcast %31 : vector<1x256xf32> to vector<16x256xf32>
    %67 = arith.addf %66, %65 : vector<16x256xf32>
    %cst_39 = arith.constant 0.000000e+00 : f32
    %68 = vector.broadcast %cst_39 : f32 to vector<16x256xf32>
    %69 = arith.maximumf %67, %68 : vector<16x256xf32>
    %cst_40 = arith.constant dense<0xFF800000> : vector<256xf32>
    %70 = vector.multi_reduction <maximumf>, %69, %cst_40 [0] : vector<16x256xf32> to vector<256xf32>
    %71 = vector.shape_cast %70 : vector<256xf32> to vector<1x256xf32>
    %72 = vector.broadcast %71 : vector<1x256xf32> to vector<16x256xf32>
    %73 = arith.subf %69, %72 : vector<16x256xf32>
    %74 = math.exp %73 : vector<16x256xf32>
    %cst_41 = arith.constant dense<0.000000e+00> : vector<256xf32>
    %75 = vector.multi_reduction <add>, %74, %cst_41 [0] : vector<16x256xf32> to vector<256xf32>
    %76 = vector.shape_cast %75 : vector<256xf32> to vector<1x256xf32>
    %77 = tpu.reciprocal %76 {approx = true} : vector<1x256xf32> -> vector<1x256xf32>
    %78 = vector.broadcast %77 : vector<1x256xf32> to vector<16x256xf32>
    %79 = arith.mulf %74, %78 : vector<16x256xf32>
    %80 = vector.shape_cast %63 : vector<128x256xf32> to vector<16x8x256xf32>
    %81 = vector.shape_cast %79 : vector<16x256xf32> to vector<16x1x256xf32>
    %82 = vector.broadcast %81 : vector<16x1x256xf32> to vector<16x8x256xf32>
    %83 = arith.mulf %80, %82 : vector<16x8x256xf32>
    %cst_42 = arith.constant dense<0.000000e+00> : vector<8x256xf32>
    %84 = vector.multi_reduction <add>, %83, %cst_42 [0] : vector<16x8x256xf32> to vector<8x256xf32>
    %c0_43 = arith.constant 0 : index
    %c0_44 = arith.constant 0 : index
    %85 = vector.load %arg12[%c0_43, %c0_44] : memref<8x8xf32, #tpu.memory_space<vmem>>, vector<8x8xf32>
    %cst_45 = arith.constant dense<0.000000e+00> : vector<8x256xf32>
    %86 = tpu.matmul %85, %84, %cst_45 {dimension_numbers = #tpu.dot_dimension_numbers<[1], [0], [0], [1], [0, 0, 1, 1], [], []>} : vector<8x8xf32>, vector<8x256xf32>, vector<8x256xf32> -> vector<8x256xf32>
    %87 = arith.mulf %86, %26 : vector<8x256xf32>
    %88 = tpu.concatenate %59, %87, %29 in 0 : vector<8x256xf32>, vector<8x256xf32>, vector<8x256xf32> -> vector<24x256xf32>
    %89 = arith.negf %88 : vector<24x256xf32>
    %90 = math.exp %89 : vector<24x256xf32>
    %cst_46 = arith.constant 1.000000e+00 : f32
    %91 = vector.broadcast %cst_46 : f32 to vector<24x256xf32>
    %92 = arith.addf %91, %90 : vector<24x256xf32>
    %93 = arith.divf %91, %92 : vector<24x256xf32>
    %c0_47 = arith.constant 0 : index
    %c0_48 = arith.constant 0 : index
    %94 = vector.load %arg13[%c0_47, %c0_48] : memref<4x24xf32, #tpu.memory_space<vmem>>, vector<4x24xf32>
    %cst_49 = arith.constant dense<0.000000e+00> : vector<4x256xf32>
    %95 = tpu.matmul %94, %93, %cst_49 {dimension_numbers = #tpu.dot_dimension_numbers<[1], [0], [0], [1], [0, 0, 1, 1], [], []>} : vector<4x24xf32>, vector<24x256xf32>, vector<4x256xf32> -> vector<4x256xf32>
    %cst_50 = arith.constant 0.000000e+00 : f32
    %96 = vector.broadcast %cst_50 : f32 to vector<4x256xf32>
    %97 = arith.maximumf %95, %96 : vector<4x256xf32>
    %c0_51 = arith.constant 0 : index
    %c0_52 = arith.constant 0 : index
    %98 = vector.load %arg14[%c0_51, %c0_52] : memref<4x4xf32, #tpu.memory_space<vmem>>, vector<4x4xf32>
    %cst_53 = arith.constant dense<0.000000e+00> : vector<4x256xf32>
    %99 = tpu.matmul %98, %97, %cst_53 {dimension_numbers = #tpu.dot_dimension_numbers<[1], [0], [0], [1], [0, 0, 1, 1], [], []>} : vector<4x4xf32>, vector<4x256xf32>, vector<4x256xf32> -> vector<4x256xf32>
    %c0_54 = arith.constant 0 : index
    %c0_55 = arith.constant 0 : index
    %c0_56 = arith.constant 0 : index
    %100 = vector.load %arg15[%c0_54, %c0_55, %c0_56] : memref<1x4x256xf32, #tpu.memory_space<vmem>>, vector<1x4x256xf32>
    %101 = vector.shape_cast %100 : vector<1x4x256xf32> to vector<4x256xf32>
    %102 = vector.shape_cast %99 : vector<4x256xf32> to vector<1x4x256xf32>
    tpu.vector_store %arg15[%c0_54, %c0_55, %c0_56], %102 {strides = array<i32>} : memref<1x4x256xf32, #tpu.memory_space<vmem>>, vector<1x4x256xf32>,
    return
  }
  func.func @transform_0(%arg0: i32, %arg1: i32) -> (i32, i32, i32) {
    %c0_i32 = arith.constant 0 : i32
    %c0_i32_0 = arith.constant 0 : i32
    return %arg0, %c0_i32, %arg1 : i32, i32, i32
  }
  func.func @transform_1(%arg0: i32, %arg1: i32) -> (i32, i32, i32) {
    %c0_i32 = arith.constant 0 : i32
    %c0_i32_0 = arith.constant 0 : i32
    return %arg0, %c0_i32, %arg1 : i32, i32, i32
  }
  func.func @transform_2(%arg0: i32, %arg1: i32) -> (i32, i32, i32) {
    %c0_i32 = arith.constant 0 : i32
    %c0_i32_0 = arith.constant 0 : i32
    return %arg0, %c0_i32, %arg1 : i32, i32, i32
  }
  func.func @transform_3(%arg0: i32, %arg1: i32) -> (i32, i32) {
    %c0_i32 = arith.constant 0 : i32
    %c0_i32_0 = arith.constant 0 : i32
    %c0_i32_1 = arith.constant 0 : i32
    return %c0_i32, %c0_i32_0 : i32, i32
  }
  func.func @transform_4(%arg0: i32, %arg1: i32) -> (i32, i32) {
    %c0_i32 = arith.constant 0 : i32
    %c0_i32_0 = arith.constant 0 : i32
    %c0_i32_1 = arith.constant 0 : i32
    return %c0_i32, %c0_i32_0 : i32, i32
  }
  func.func @transform_5(%arg0: i32, %arg1: i32) -> (i32, i32) {
    %c0_i32 = arith.constant 0 : i32
    %c0_i32_0 = arith.constant 0 : i32
    %c0_i32_1 = arith.constant 0 : i32
    return %c0_i32, %c0_i32_0 : i32, i32
  }
  func.func @transform_6(%arg0: i32, %arg1: i32) -> (i32, i32) {
    %c0_i32 = arith.constant 0 : i32
    %c0_i32_0 = arith.constant 0 : i32
    %c0_i32_1 = arith.constant 0 : i32
    return %c0_i32, %c0_i32_0 : i32, i32
  }
  func.func @transform_7(%arg0: i32, %arg1: i32) -> (i32, i32) {
    %c0_i32 = arith.constant 0 : i32
    %c0_i32_0 = arith.constant 0 : i32
    %c0_i32_1 = arith.constant 0 : i32
    return %c0_i32, %c0_i32_0 : i32, i32
  }
  func.func @transform_8(%arg0: i32, %arg1: i32) -> (i32, i32) {
    %c0_i32 = arith.constant 0 : i32
    %c0_i32_0 = arith.constant 0 : i32
    %c0_i32_1 = arith.constant 0 : i32
    return %c0_i32, %c0_i32_0 : i32, i32
  }
  func.func @transform_9(%arg0: i32, %arg1: i32) -> (i32, i32) {
    %c0_i32 = arith.constant 0 : i32
    %c0_i32_0 = arith.constant 0 : i32
    %c0_i32_1 = arith.constant 0 : i32
    return %c0_i32, %c0_i32_0 : i32, i32
  }
  func.func @transform_10(%arg0: i32, %arg1: i32) -> (i32, i32) {
    %c0_i32 = arith.constant 0 : i32
    %c0_i32_0 = arith.constant 0 : i32
    %c0_i32_1 = arith.constant 0 : i32
    return %c0_i32, %c0_i32_0 : i32, i32
  }
  func.func @transform_11(%arg0: i32, %arg1: i32) -> (i32, i32) {
    %c0_i32 = arith.constant 0 : i32
    %c0_i32_0 = arith.constant 0 : i32
    %c0_i32_1 = arith.constant 0 : i32
    return %c0_i32, %c0_i32_0 : i32, i32
  }
  func.func @transform_12(%arg0: i32, %arg1: i32) -> (i32, i32) {
    %c0_i32 = arith.constant 0 : i32
    %c0_i32_0 = arith.constant 0 : i32
    %c0_i32_1 = arith.constant 0 : i32
    return %c0_i32, %c0_i32_0 : i32, i32
  }
  func.func @transform_13(%arg0: i32, %arg1: i32) -> (i32, i32, i32) {
    %c0_i32 = arith.constant 0 : i32
    %c0_i32_0 = arith.constant 0 : i32
    return %arg0, %c0_i32, %arg1 : i32, i32, i32
  }
}

</mosaic_0001>

<llo_original>
// kernel: graph_reasoning_forward.1
$region0: #{graph_reasoning_forward.1}
  #allocation0 [shape = 'u32[]', space=smem, size = 0x4, offset = 0x4, fixed_abs, tag = 'smem constant byte address 0x4 - core index']
  #allocation1 [shape = 'u32[72,128]{1,0:T(1,128)}', space=vmem, size = 0x9000, scoped, tag = 'internal scratch']
  %s0 = inlined_call_operand.vmem [shape: f32[2,4,256], index: 0, kind: input, shape index: {}]
  %s1 = inlined_call_operand.vmem [shape: bf16[2,16,256], index: 1, kind: input, shape index: {}]
  %s2 = inlined_call_operand.vmem [shape: bf16[2,64,256], index: 2, kind: input, shape index: {}]
  %s3 = inlined_call_operand.vmem [shape: f32[24,4], index: 3, kind: input, shape index: {}]
  %s4 = inlined_call_operand.vmem [shape: f32[10,8], index: 4, kind: input, shape index: {}]
  %s5 = inlined_call_operand.vmem [shape: bf16[32,16], index: 5, kind: input, shape index: {}]
  %s6 = inlined_call_operand.vmem [shape: f32[4,32], index: 6, kind: input, shape index: {}]
  %s7 = inlined_call_operand.vmem [shape: f32[8,8], index: 7, kind: input, shape index: {}]
  %s8 = inlined_call_operand.vmem [shape: bf16[128,64], index: 8, kind: input, shape index: {}]
  %s9 = inlined_call_operand.vmem [shape: f32[16,128], index: 9, kind: input, shape index: {}]
  %s10 = inlined_call_operand.vmem [shape: f32[8,8], index: 10, kind: input, shape index: {}]
  %s11 = inlined_call_operand.vmem [shape: f32[4,24], index: 11, kind: input, shape index: {}]
  %s12 = inlined_call_operand.vmem [shape: f32[4,4], index: 12, kind: input, shape index: {}]
  %s13 = inlined_call_operand.vmem [shape: f32[2,4,256], index: 13, kind: output, shape index: {}]
  %s14 = sld [smem:[#allocation0]]
  $region85: #{graph_reasoning_forward.1} parent=0
    _
  %s16 = ssub.s32 1, %s14
  %s17 = scalar_select 0, %s16, %s14
  loop: start=0, step=1, limit=4
  $region2: #{graph_reasoning_forward.1} parent=0 // loop_pre_header
    _
  $region3: #{graph_reasoning_forward.1} parent=0 // loop_header
    %s19 = sphi 0, %s23
    %p20 = scmp.ge.s32.totalorder %s19, 4
    %s26 = sphi 0, %s38
    %s27 = sphi 0, %s34
    %s28 = sphi 0, %s26
    %s29 = sphi 0, %s27
    %s30 = sphi 0, %s28
    %s31 = sphi 0, %s29
    %s43 = sphi 0, %s45
    %s46 = sphi 0, %s43
    %s47 = sphi 0, %s46
    %s63 = sphi 0, %s47
    %s71 = sphi 0, %s73
    %s74 = sphi 0, %s71
    %s75 = sphi 0, %s74
    %s91 = sphi 0, %s75
    %s99 = sphi 0, %s101
    %s102 = sphi 0, %s99
    %s103 = sphi 0, %s102
    %s119 = sphi 0, %s103
    %s123 = sphi 0, %s123
    %s125 = sphi 0, %s123
    %s126 = sphi 0, %s125
    %s140 = sphi 0, %s126
    %s144 = sphi 0, %s144
    %s146 = sphi 0, %s144
    %s147 = sphi 0, %s146
    %s161 = sphi 0, %s147
    %s165 = sphi 0, %s165
    %s167 = sphi 0, %s165
    %s168 = sphi 0, %s167
    %s182 = sphi 0, %s168
    %s186 = sphi 0, %s186
    %s188 = sphi 0, %s186
    %s189 = sphi 0, %s188
    %s203 = sphi 0, %s189
    %s207 = sphi 0, %s207
    %s209 = sphi 0, %s207
    %s210 = sphi 0, %s209
    %s224 = sphi 0, %s210
    %s228 = sphi 0, %s228
    %s230 = sphi 0, %s228
    %s231 = sphi 0, %s230
    %s245 = sphi 0, %s231
    %s249 = sphi 0, %s249
    %s251 = sphi 0, %s249
    %s252 = sphi 0, %s251
    %s266 = sphi 0, %s252
    %s270 = sphi 0, %s270
    %s272 = sphi 0, %s270
    %s273 = sphi 0, %s272
    %s287 = sphi 0, %s273
    %s291 = sphi 0, %s291
    %s293 = sphi 0, %s291
    %s294 = sphi 0, %s293
    %s308 = sphi 0, %s294
    %s312 = sphi 0, %s312
    %s314 = sphi 0, %s312
    %s315 = sphi 0, %s314
    %s329 = sphi 0, %s315
    %s337 = sphi 0, %s339
    %s340 = sphi 0, %s337
    %s341 = sphi 0, %s340
    %s357 = sphi 0, %s341
  $region4: #{graph_reasoning_forward.1} parent=0 // loop_header_branch
    %22 = sbr.rel (%p20) target = $region8
  $region5: #{graph_reasoning_forward.1} parent=0 // loop_body
    %s24 = ssub.s32 %s19, 1
    %s25 = ssub.s32 %s19, 2
    %s32 = sadd.s32 1, %s27
    %p33 = scmp.ge.s32.totalorder %s32, 1
    %s34 = scalar_select %p33, 0, %s32
    %s35 = sadd.s32 1, %s26
    %s36 = scalar_select %p33, %s35, %s26
    %p37 = scmp.ge.s32.totalorder %s36, 2
    %s38 = scalar_select %p37, 0, %s36
    %s39 = ssub.s32 %s26, %s38
    %s40 = ssub.s32 %s27, %s34
    %s41 = sor.u32 %s39, %s40
    %p42 = scmp.eq.s32.totalorder %s41, 0
    %s44 = sadd.s32 %s43, 1
    %s45 = scalar_select %p42, %s43, %s44
    %p48 = pneg %p42
    %p49 = scmp.eq.s32.totalorder %s19, 1
    %p50 = por %p48, %p49
    %p51 = scmp.ne.s32.totalorder %s43, %s46
    %p52 = scmp.eq.s32.totalorder %s19, 0
    %p53 = por %p51, %p52
    %p54 = scmp.ne.s32.totalorder %s43, %s46
    %p55 = scmp.eq.s32.totalorder %s24, 1
    %p56 = por %p54, %p55
    %p57 = scmp.ne.s32.totalorder %s46, %s47
    %p58 = scmp.eq.s32.totalorder %s24, 0
    %p59 = por %p57, %p58
    %p60 = scmp.ne.s32.totalorder %s46, %s47
    %p61 = scmp.eq.s32.totalorder %s25, 1
    %p62 = por %p60, %p61
    %p64 = scmp.ne.s32.totalorder %s47, %s63
    %p65 = scmp.eq.s32.totalorder %s25, 0
    %p66 = por %p64, %p65
    %s67 = ssub.s32 %s26, %s38
    %s68 = ssub.s32 %s27, %s34
    %s69 = sor.u32 %s67, %s68
    %p70 = scmp.eq.s32.totalorder %s69, 0
    %s72 = sadd.s32 %s71, 1
    %s73 = scalar_select %p70, %s71, %s72
    %p76 = pneg %p70
    %p77 = scmp.eq.s32.totalorder %s19, 1
    %p78 = por %p76, %p77
    %p79 = scmp.ne.s32.totalorder %s71, %s74
    %p80 = scmp.eq.s32.totalorder %s19, 0
    %p81 = por %p79, %p80
    %p82 = scmp.ne.s32.totalorder %s71, %s74
    %p83 = scmp.eq.s32.totalorder %s24, 1
    %p84 = por %p82, %p83
    %p85 = scmp.ne.s32.totalorder %s74, %s75
    %p86 = scmp.eq.s32.totalorder %s24, 0
    %p87 = por %p85, %p86
    %p88 = scmp.ne.s32.totalorder %s74, %s75
    %p89 = scmp.eq.s32.totalorder %s25, 1
    %p90 = por %p88, %p89
    %p92 = scmp.ne.s32.totalorder %s75, %s91
    %p93 = scmp.eq.s32.totalorder %s25, 0
    %p94 = por %p92, %p93
    %s95 = ssub.s32 %s26, %s38
    %s96 = ssub.s32 %s27, %s34
    %s97 = sor.u32 %s95, %s96
    %p98 = scmp.eq.s32.totalorder %s97, 0
    %s100 = sadd.s32 %s99, 1
    %s101 = scalar_select %p98, %s99, %s100
    %p104 = pneg %p98
    %p105 = scmp.eq.s32.totalorder %s19, 1
    %p106 = por %p104, %p105
    %p107 = scmp.ne.s32.totalorder %s99, %s102
    %p108 = scmp.eq.s32.totalorder %s19, 0
    %p109 = por %p107, %p108
    %p110 = scmp.ne.s32.totalorder %s99, %s102
    %p111 = scmp.eq.s32.totalorder %s24, 1
    %p112 = por %p110, %p111
    %p113 = scmp.ne.s32.totalorder %s102, %s103
    %p114 = scmp.eq.s32.totalorder %s24, 0
    %p115 = por %p113, %p114
    %p116 = scmp.ne.s32.totalorder %s102, %s103
    %p117 = scmp.eq.s32.totalorder %s25, 1
    %p118 = por %p116, %p117
    %p120 = scmp.ne.s32.totalorder %s103, %s119
    %p121 = scmp.eq.s32.totalorder %s25, 0
    %p122 = por %p120, %p121
    %s124 = sadd.s32 %s123, 1
    %p127 = scmp.eq.s32.totalorder %s19, 1
    %p128 = scmp.ne.s32.totalorder %s123, %s125
    %p129 = scmp.eq.s32.totalorder %s19, 0
    %p130 = por %p128, %p129
    %p131 = scmp.ne.s32.totalorder %s123, %s125
    %p132 = scmp.eq.s32.totalorder %s24, 1
    %p133 = por %p131, %p132
    %p134 = scmp.ne.s32.totalorder %s125, %s126
    %p135 = scmp.eq.s32.totalorder %s24, 0
    %p136 = por %p134, %p135
    %p137 = scmp.ne.s32.totalorder %s125, %s126
    %p138 = scmp.eq.s32.totalorder %s25, 1
    %p139 = por %p137, %p138
    %p141 = scmp.ne.s32.totalorder %s126, %s140
    %p142 = scmp.eq.s32.totalorder %s25, 0
    %p143 = por %p141, %p142
    %s145 = sadd.s32 %s144, 1
    %p148 = scmp.eq.s32.totalorder %s19, 1
    %p149 = scmp.ne.s32.totalorder %s144, %s146
    %p150 = scmp.eq.s32.totalorder %s19, 0
    %p151 = por %p149, %p150
    %p152 = scmp.ne.s32.totalorder %s144, %s146
    %p153 = scmp.eq.s32.totalorder %s24, 1
    %p154 = por %p152, %p153
    %p155 = scmp.ne.s32.totalorder %s146, %s147
    %p156 = scmp.eq.s32.totalorder %s24, 0
    %p157 = por %p155, %p156
    %p158 = scmp.ne.s32.totalorder %s146, %s147
    %p159 = scmp.eq.s32.totalorder %s25, 1
    %p160 = por %p158, %p159
    %p162 = scmp.ne.s32.totalorder %s147, %s161
    %p163 = scmp.eq.s32.totalorder %s25, 0
    %p164 = por %p162, %p163
    %s166 = sadd.s32 %s165, 1
    %p169 = scmp.eq.s32.totalorder %s19, 1
    %p170 = scmp.ne.s32.totalorder %s165, %s167
    %p171 = scmp.eq.s32.totalorder %s19, 0
    %p172 = por %p170, %p171
    %p173 = scmp.ne.s32.totalorder %s165, %s167
    %p174 = scmp.eq.s32.totalorder %s24, 1
    %p175 = por %p173, %p174
    %p176 = scmp.ne.s32.totalorder %s167, %s168
    %p177 = scmp.eq.s32.totalorder %s24, 0
    %p178 = por %p176, %p177
    %p179 = scmp.ne.s32.totalorder %s167, %s168
    %p180 = scmp.eq.s32.totalorder %s25, 1
    %p181 = por %p179, %p180
    %p183 = scmp.ne.s32.totalorder %s168, %s182
    %p184 = scmp.eq.s32.totalorder %s25, 0
    %p185 = por %p183, %p184
    %s187 = sadd.s32 %s186, 1
    %p190 = scmp.eq.s32.totalorder %s19, 1
    %p191 = scmp.ne.s32.totalorder %s186, %s188
    %p192 = scmp.eq.s32.totalorder %s19, 0
    %p193 = por %p191, %p192
    %p194 = scmp.ne.s32.totalorder %s186, %s188
    %p195 = scmp.eq.s32.totalorder %s24, 1
    %p196 = por %p194, %p195
    %p197 = scmp.ne.s32.totalorder %s188, %s189
    %p198 = scmp.eq.s32.totalorder %s24, 0
    %p199 = por %p197, %p198
    %p200 = scmp.ne.s32.totalorder %s188, %s189
    %p201 = scmp.eq.s32.totalorder %s25, 1
    %p202 = por %p200, %p201
    %p204 = scmp.ne.s32.totalorder %s189, %s203
    %p205 = scmp.eq.s32.totalorder %s25, 0
    %p206 = por %p204, %p205
    %s208 = sadd.s32 %s207, 1
    %p211 = scmp.eq.s32.totalorder %s19, 1
    %p212 = scmp.ne.s32.totalorder %s207, %s209
    %p213 = scmp.eq.s32.totalorder %s19, 0
    %p214 = por %p212, %p213
    %p215 = scmp.ne.s32.totalorder %s207, %s209
    %p216 = scmp.eq.s32.totalorder %s24, 1
    %p217 = por %p215, %p216
    %p218 = scmp.ne.s32.totalorder %s209, %s210
    %p219 = scmp.eq.s32.totalorder %s24, 0
    %p220 = por %p218, %p219
    %p221 = scmp.ne.s32.totalorder %s209, %s210
    %p222 = scmp.eq.s32.totalorder %s25, 1
    %p223 = por %p221, %p222
    %p225 = scmp.ne.s32.totalorder %s210, %s224
    %p226 = scmp.eq.s32.totalorder %s25, 0
    %p227 = por %p225, %p226
    %s229 = sadd.s32 %s228, 1
    %p232 = scmp.eq.s32.totalorder %s19, 1
    %p233 = scmp.ne.s32.totalorder %s228, %s230
    %p234 = scmp.eq.s32.totalorder %s19, 0
    %p235 = por %p233, %p234
    %p236 = scmp.ne.s32.totalorder %s228, %s230
    %p237 = scmp.eq.s32.totalorder %s24, 1
    %p238 = por %p236, %p237
    %p239 = scmp.ne.s32.totalorder %s230, %s231
    %p240 = scmp.eq.s32.totalorder %s24, 0
    %p241 = por %p239, %p240
    %p242 = scmp.ne.s32.totalorder %s230, %s231
    %p243 = scmp.eq.s32.totalorder %s25, 1
    %p244 = por %p242, %p243
    %p246 = scmp.ne.s32.totalorder %s231, %s245
    %p247 = scmp.eq.s32.totalorder %s25, 0
    %p248 = por %p246, %p247
    %s250 = sadd.s32 %s249, 1
    %p253 = scmp.eq.s32.totalorder %s19, 1
    %p254 = scmp.ne.s32.totalorder %s249, %s251
    %p255 = scmp.eq.s32.totalorder %s19, 0
    %p256 = por %p254, %p255
    %p257 = scmp.ne.s32.totalorder %s249, %s251
    %p258 = scmp.eq.s32.totalorder %s24, 1
    %p259 = por %p257, %p258
    %p260 = scmp.ne.s32.totalorder %s251, %s252
    %p261 = scmp.eq.s32.totalorder %s24, 0
    %p262 = por %p260, %p261
    %p263 = scmp.ne.s32.totalorder %s251, %s252
    %p264 = scmp.eq.s32.totalorder %s25, 1
    %p265 = por %p263, %p264
    %p267 = scmp.ne.s32.totalorder %s252, %s266
    %p268 = scmp.eq.s32.totalorder %s25, 0
    %p269 = por %p267, %p268
    %s271 = sadd.s32 %s270, 1
    %p274 = scmp.eq.s32.totalorder %s19, 1
    %p275 = scmp.ne.s32.totalorder %s270, %s272
    %p276 = scmp.eq.s32.totalorder %s19, 0
    %p277 = por %p275, %p276
    %p278 = scmp.ne.s32.totalorder %s270, %s272
    %p279 = scmp.eq.s32.totalorder %s24, 1
    %p280 = por %p278, %p279
    %p281 = scmp.ne.s32.totalorder %s272, %s273
    %p282 = scmp.eq.s32.totalorder %s24, 0
    %p283 = por %p281, %p282
    %p284 = scmp.ne.s32.totalorder %s272, %s273
    %p285 = scmp.eq.s32.totalorder %s25, 1
    %p286 = por %p284, %p285
    %p288 = scmp.ne.s32.totalorder %s273, %s287
    %p289 = scmp.eq.s32.totalorder %s25, 0
    %p290 = por %p288, %p289
    %s292 = sadd.s32 %s291, 1
    %p295 = scmp.eq.s32.totalorder %s19, 1
    %p296 = scmp.ne.s32.totalorder %s291, %s293
    %p297 = scmp.eq.s32.totalorder %s19, 0
    %p298 = por %p296, %p297
    %p299 = scmp.ne.s32.totalorder %s291, %s293
    %p300 = scmp.eq.s32.totalorder %s24, 1
    %p301 = por %p299, %p300
    %p302 = scmp.ne.s32.totalorder %s293, %s294
    %p303 = scmp.eq.s32.totalorder %s24, 0
    %p304 = por %p302, %p303
    %p305 = scmp.ne.s32.totalorder %s293, %s294
    %p306 = scmp.eq.s32.totalorder %s25, 1
    %p307 = por %p305, %p306
    %p309 = scmp.ne.s32.totalorder %s294, %s308
    %p310 = scmp.eq.s32.totalorder %s25, 0
    %p311 = por %p309, %p310
    %s313 = sadd.s32 %s312, 1
    %p316 = scmp.eq.s32.totalorder %s19, 1
    %p317 = scmp.ne.s32.totalorder %s312, %s314
    %p318 = scmp.eq.s32.totalorder %s19, 0
    %p319 = por %p317, %p318
    %p320 = scmp.ne.s32.totalorder %s312, %s314
    %p321 = scmp.eq.s32.totalorder %s24, 1
    %p322 = por %p320, %p321
    %p323 = scmp.ne.s32.totalorder %s314, %s315
    %p324 = scmp.eq.s32.totalorder %s24, 0
    %p325 = por %p323, %p324
    %p326 = scmp.ne.s32.totalorder %s314, %s315
    %p327 = scmp.eq.s32.totalorder %s25, 1
    %p328 = por %p326, %p327
    %p330 = scmp.ne.s32.totalorder %s315, %s329
    %p331 = scmp.eq.s32.totalorder %s25, 0
    %p332 = por %p330, %p331
    %s333 = ssub.s32 %s26, %s38
    %s334 = ssub.s32 %s27, %s34
    %s335 = sor.u32 %s333, %s334
    %p336 = scmp.eq.s32.totalorder %s335, 0
    %s338 = sadd.s32 %s337, 1
    %s339 = scalar_select %p336, %s337, %s338
    %p342 = pneg %p336
    %p343 = scmp.eq.s32.totalorder %s19, 1
    %p344 = por %p342, %p343
    %p345 = scmp.ne.s32.totalorder %s337, %s340
    %p346 = scmp.eq.s32.totalorder %s19, 0
    %p347 = por %p345, %p346
    %p348 = scmp.ne.s32.totalorder %s337, %s340
    %p349 = scmp.eq.s32.totalorder %s24, 1
    %p350 = por %p348, %p349
    %p351 = scmp.ne.s32.totalorder %s340, %s341
    %p352 = scmp.eq.s32.totalorder %s24, 0
    %p353 = por %p351, %p352
    %p354 = scmp.ne.s32.totalorder %s340, %s341
    %p355 = scmp.eq.s32.totalorder %s25, 1
    %p356 = por %p354, %p355
    %p358 = scmp.ne.s32.totalorder %s341, %s357
    %p359 = scmp.eq.s32.totalorder %s25, 0
    %p360 = por %p358, %p359
    %p361 = scmp.le.s32.totalorder 1, %s19
    %p362 = scmp.lt.s32.totalorder %s19, 3
    %p363 = pnand %p361, %p362
    %p364 = pneg %p363
    // Predicated region
    $region9: #{graph_reasoning_forward.1} parent=5 // pred_check
      _
    $region10: #{graph_reasoning_forward.1} parent=5 // pred_check_branch
      %366 = sbr.rel (%p363) target = $region12
    $region11: #{graph_reasoning_forward.1} parent=5 // pred_region
      %s367 = ssub.s32 %s19, 1
      // Predicated region
      $region13: #{graph_reasoning_forward.1} parent=11 // pred_check
        %p368 = pneg %p136
      $region14: #{graph_reasoning_forward.1} parent=11 // pred_check_branch
        %370 = sbr.rel (%p368) target = $region16
      $region15: #{graph_reasoning_forward.1} parent=11 // pred_region
        _
      $region16: #{graph_reasoning_forward.1} parent=11 // pred_fallthru
        _
      // Predicated region
      $region17: #{graph_reasoning_forward.1} parent=11 // pred_check
        %p371 = pneg %p157
      $region18: #{graph_reasoning_forward.1} parent=11 // pred_check_branch
        %373 = sbr.rel (%p371) target = $region20
      $region19: #{graph_reasoning_forward.1} parent=11 // pred_region
        _
      $region20: #{graph_reasoning_forward.1} parent=11 // pred_fallthru
        _
      // Predicated region
      $region21: #{graph_reasoning_forward.1} parent=11 // pred_check
        %p374 = pneg %p178
      $region22: #{graph_reasoning_forward.1} parent=11 // pred_check_branch
        %376 = sbr.rel (%p374) target = $region24
      $region23: #{graph_reasoning_forward.1} parent=11 // pred_region
        _
      $region24: #{graph_reasoning_forward.1} parent=11 // pred_fallthru
        _
      // Predicated region
      $region25: #{graph_reasoning_forward.1} parent=11 // pred_check
        %p377 = pneg %p199
      $region26: #{graph_reasoning_forward.1} parent=11 // pred_check_branch
        %379 = sbr.rel (%p377) target = $region28
      $region27: #{graph_reasoning_forward.1} parent=11 // pred_region
        _
      $region28: #{graph_reasoning_forward.1} parent=11 // pred_fallthru
        _
      // Predicated region
      $region29: #{graph_reasoning_forward.1} parent=11 // pred_check
        %p380 = pneg %p220
      $region30: #{graph_reasoning_forward.1} parent=11 // pred_check_branch
        %382 = sbr.rel (%p380) target = $region32
      $region31: #{graph_reasoning_forward.1} parent=11 // pred_region
        _
      $region32: #{graph_reasoning_forward.1} parent=11 // pred_fallthru
        _
      // Predicated region
      $region33: #{graph_reasoning_forward.1} parent=11 // pred_check
        %p383 = pneg %p241
      $region34: #{graph_reasoning_forward.1} parent=11 // pred_check_branch
        %385 = sbr.rel (%p383) target = $region36
      $region35: #{graph_reasoning_forward.1} parent=11 // pred_region
        _
      $region36: #{graph_reasoning_forward.1} parent=11 // pred_fallthru
        _
      // Predicated region
      $region37: #{graph_reasoning_forward.1} parent=11 // pred_check
        %p386 = pneg %p262
      $region38: #{graph_reasoning_forward.1} parent=11 // pred_check_branch
        %388 = sbr.rel (%p386) target = $region40
      $region39: #{graph_reasoning_forward.1} parent=11 // pred_region
        _
      $region40: #{graph_reasoning_forward.1} parent=11 // pred_fallthru
        _
      // Predicated region
      $region41: #{graph_reasoning_forward.1} parent=11 // pred_check
        %p389 = pneg %p283
      $region42: #{graph_reasoning_forward.1} parent=11 // pred_check_branch
        %391 = sbr.rel (%p389) target = $region44
      $region43: #{graph_reasoning_forward.1} parent=11 // pred_region
        _
      $region44: #{graph_reasoning_forward.1} parent=11 // pred_fallthru
        _
      // Predicated region
      $region45: #{graph_reasoning_forward.1} parent=11 // pred_check
        %p392 = pneg %p304
      $region46: #{graph_reasoning_forward.1} parent=11 // pred_check_branch
        %394 = sbr.rel (%p392) target = $region48
      $region47: #{graph_reasoning_forward.1} parent=11 // pred_region
        _
      $region48: #{graph_reasoning_forward.1} parent=11 // pred_fallthru
        _
      // Predicated region
      $region49: #{graph_reasoning_forward.1} parent=11 // pred_check
        %p395 = pneg %p325
      $region50: #{graph_reasoning_forward.1} parent=11 // pred_check_branch
        %397 = sbr.rel (%p395) target = $region52
      $region51: #{graph_reasoning_forward.1} parent=11 // pred_region
        _
      $region52: #{graph_reasoning_forward.1} parent=11 // pred_fallthru
        _
    $region12: #{graph_reasoning_forward.1} parent=5 // pred_fallthru
      _
    %p398 = scmp.lt.s32.totalorder %s19, 2
    // Predicated region
    $region53: #{graph_reasoning_forward.1} parent=5 // pred_check
      %p399 = pneg %p398
    $region54: #{graph_reasoning_forward.1} parent=5 // pred_check_branch
      %401 = sbr.rel (%p399) target = $region56
    $region55: #{graph_reasoning_forward.1} parent=5 // pred_region
      // Predicated region
      $region57: #{graph_reasoning_forward.1} parent=55 // pred_check
        %p402 = pneg %p53
      $region58: #{graph_reasoning_forward.1} parent=55 // pred_check_branch
        %404 = sbr.rel (%p402) target = $region60
      $region59: #{graph_reasoning_forward.1} parent=55 // pred_region
        %s405 = smul.u32 2, %s27
        %p406 = scmp.lt.s32.totalorder %s26, 1
        %s407 = scalar_select %p406, %s26, 1
        %p408 = scmp.lt.s32.totalorder %s405, 1
        %s409 = scalar_select %p408, %s405, 1
        %s410 = smul.addr %s407, 2
        %s411 = sadd.s32 %s409, %s410
        %s412 = smul.addr %s411, 4
        %s413 = scalar_lea.vmem %s0, %s412
        %s414 = smul.u32 2, %s27
      $region60: #{graph_reasoning_forward.1} parent=55 // pred_fallthru
        _
      // Predicated region
      $region61: #{graph_reasoning_forward.1} parent=55 // pred_check
        %p415 = pneg %p81
      $region62: #{graph_reasoning_forward.1} parent=55 // pred_check_branch
        %417 = sbr.rel (%p415) target = $region64
      $region63: #{graph_reasoning_forward.1} parent=55 // pred_region
        %s418 = smul.u32 2, %s27
        %p419 = scmp.lt.s32.totalorder %s26, 1
        %s420 = scalar_select %p419, %s26, 1
        %p421 = scmp.lt.s32.totalorder %s418, 1
        %s422 = scalar_select %p421, %s418, 1
        %s423 = smul.addr %s420, 4
        %s424 = sadd.s32 %s422, %s423
        %s425 = smul.addr %s424, 4
        %s426 = scalar_lea.vmem %s1, %s425
        %s427 = smul.u32 2, %s27
      $region64: #{graph_reasoning_forward.1} parent=55 // pred_fallthru
        _
      // Predicated region
      $region65: #{graph_reasoning_forward.1} parent=55 // pred_check
        %p428 = pneg %p109
      $region66: #{graph_reasoning_forward.1} parent=55 // pred_check_branch
        %430 = sbr.rel (%p428) target = $region68
      $region67: #{graph_reasoning_forward.1} parent=55 // pred_region
        %s431 = smul.u32 2, %s27
        %p432 = scmp.lt.s32.totalorder %s26, 1
        %s433 = scalar_select %p432, %s26, 1
        %p434 = scmp.lt.s32.totalorder %s431, 1
        %s435 = scalar_select %p434, %s431, 1
        %s436 = smul.addr %s433, 16
        %s437 = sadd.s32 %s435, %s436
        %s438 = smul.addr %s437, 4
        %s439 = scalar_lea.vmem %s2, %s438
        %s440 = smul.u32 2, %s27
      $region68: #{graph_reasoning_forward.1} parent=55 // pred_fallthru
        _
    $region56: #{graph_reasoning_forward.1} parent=5 // pred_fallthru
      _
    %p441 = scmp.le.s32.totalorder 1, %s19
    %p442 = scmp.lt.s32.totalorder %s19, 3
    %p443 = pnand %p441, %p442
    %p444 = pneg %p443
    // Predicated region
    $region69: #{graph_reasoning_forward.1} parent=5 // pred_check
      _
    $region70: #{graph_reasoning_forward.1} parent=5 // pred_check_branch
      %446 = sbr.rel (%p443) target = $region72
    $region71: #{graph_reasoning_forward.1} parent=5 // pred_region
      %s447 = ssub.s32 %s19, 1
      %s448 = smul.u32 2, %s29
      %p449 = scmp.lt.s32.totalorder %s28, 1
      %s450 = scalar_select %p449, %s28, 1
      %p451 = scmp.lt.s32.totalorder %s448, 1
      %s452 = scalar_select %p451, %s448, 1
      %s453 = smul.addr %s450, 2
      %s454 = sadd.s32 %s452, %s453
      %s455 = smul.addr %s454, 4
      %s456 = scalar_lea.vmem %s0, %s455
      %p457 = pneg %p59
      %p458 = pneg %p56
      %s459 = smul.u32 2, %s29
      %p460 = scmp.lt.s32.totalorder %s28, 1
      %s461 = scalar_select %p460, %s28, 1
      %p462 = scmp.lt.s32.totalorder %s459, 1
      %s463 = scalar_select %p462, %s459, 1
      %s464 = smul.addr %s461, 4
      %s465 = sadd.s32 %s463, %s464
      %s466 = smul.addr %s465, 4
      %s467 = scalar_lea.vmem %s1, %s466
      %p468 = pneg %p87
      %p469 = pneg %p84
      %s470 = smul.u32 2, %s29
      %p471 = scmp.lt.s32.totalorder %s28, 1
      %s472 = scalar_select %p471, %s28, 1
      %p473 = scmp.lt.s32.totalorder %s470, 1
      %s474 = scalar_select %p473, %s470, 1
      %s475 = smul.addr %s472, 16
      %s476 = sadd.s32 %s474, %s475
      %s477 = smul.addr %s476, 4
      %s478 = scalar_lea.vmem %s2, %s477
      %p479 = pneg %p115
      %p480 = pneg %p112
      %p481 = pneg %p136
      %p482 = pneg %p133
      %p483 = pneg %p157
      %p484 = pneg %p154
      %p485 = pneg %p178
      %p486 = pneg %p175
      %p487 = pneg %p199
      %p488 = pneg %p196
      %p489 = pneg %p220
      %p490 = pneg %p217
      %p491 = pneg %p241
      %p492 = pneg %p238
      %p493 = pneg %p262
      %p494 = pneg %p259
      %p495 = pneg %p283
      %p496 = pneg %p280
      %p497 = pneg %p304
      %p498 = pneg %p301
      %p499 = pneg %p325
      %p500 = pneg %p322
      %p501 = pneg %p353
      %p502 = pneg %p350
      %s503 = smul.u32 2, %s29
      %p504 = scmp.lt.s32.totalorder %s28, 1
      %s505 = scalar_select %p504, %s28, 1
      %p506 = scmp.lt.s32.totalorder %s503, 1
      %s507 = scalar_select %p506, %s503, 1
      %s508 = smul.addr %s505, 2
      %s509 = sadd.s32 %s507, %s508
      %s510 = smul.addr %s509, 4
      %s511 = scalar_lea.vmem %s13, %s510
      %s512 = smul.u32 2, %s29
      %p513 = scmp.lt.s32.totalorder %s28, 1
      %s514 = scalar_select %p513, %s28, 1
      %p515 = scmp.lt.s32.totalorder %s512, 1
      %s516 = scalar_select %p515, %s512, 1
      %s517 = smul.addr %s514, 2
      %s518 = sadd.s32 %s516, %s517
      %s519 = smul.addr %s518, 4
      %s520 = scalar_lea.vmem %s0, %s519
      %s521 = smul.u32 2, %s29
      %s522 = smul.u32 2, %s29
      %p523 = scmp.lt.s32.totalorder %s28, 1
      %s524 = scalar_select %p523, %s28, 1
      %p525 = scmp.lt.s32.totalorder %s522, 1
      %s526 = scalar_select %p525, %s522, 1
      %s527 = smul.addr %s524, 4
      %s528 = sadd.s32 %s526, %s527
      %s529 = smul.addr %s528, 4
      %s530 = scalar_lea.vmem %s1, %s529
      %s531 = smul.u32 2, %s29
      %s532 = smul.u32 2, %s29
      %p533 = scmp.lt.s32.totalorder %s28, 1
      %s534 = scalar_select %p533, %s28, 1
      %p535 = scmp.lt.s32.totalorder %s532, 1
      %s536 = scalar_select %p535, %s532, 1
      %s537 = smul.addr %s534, 16
      %s538 = sadd.s32 %s536, %s537
      %s539 = smul.addr %s538, 4
      %s540 = scalar_lea.vmem %s2, %s539
      %s541 = smul.u32 2, %s29
      %s542 = smul.u32 2, %s29
      %p543 = scmp.lt.s32.totalorder %s28, 1
      %s544 = scalar_select %p543, %s28, 1
      %p545 = scmp.lt.s32.totalorder %s542, 1
      %s546 = scalar_select %p545, %s542, 1
      %s547 = smul.addr %s544, 2
      %s548 = sadd.s32 %s546, %s547
      %s549 = smul.addr %s548, 4
      %s550 = scalar_lea.vmem %s13, %s549
      %s551 = smul.u32 2, %s29
      %v553 = vld [vmem:[%s520] sm:$0xff]
      %v554 = vld [vmem:[%s530] sm:$0xff]
      %v555 = vld [vmem:[%s530 + $0x8] sm:$0xff]
      %v556 = vld [vmem:[%s540] sm:$0xff]
      %v557 = vld [vmem:[%s540 + $0x8] sm:$0xff]
      %v558 = vld [vmem:[%s540 + $0x10] sm:$0xff]
      %v559 = vld [vmem:[%s540 + $0x18] sm:$0xff]
      %v560 = vld [vmem:[%s540 + $0x20] sm:$0xff]
      %v561 = vld [vmem:[%s540 + $0x28] sm:$0xff]
      %v562 = vld [vmem:[%s540 + $0x30] sm:$0xff]
      %v563 = vld [vmem:[%s540 + $0x38] sm:$0xff]
      %v564 = vld [vmem:[%s3] sm:$0xff]
      %v565 = vld [vmem:[%s3 + $0x8] sm:$0xff]
      %v566 = vld [vmem:[%s3 + $0x10] sm:$0xff]
      %568 = vst [vmem:[#allocation1] ss:$2 sm:$0xff] %v553
      %v569 = vld.sshfl [vmem:[#allocation1] sm:$0xff pattern:$0x75316420]
      %v570 = vld.sshfl [vmem:[#allocation1 + $0x8] sm:$0xff pattern:$0x75316420]
      %vm571 = vcmask 31744
      %v573 = vsel %vm571, %v564, 0
      %v576 = vsel %vm571, %v565, 0
      %v579 = vsel %vm571, %v566, 0
      %vm581 = vcmask 1043456
      %v582 = vsel %vm581, %v569, 0
      %v584 = vsel %vm581, %v570, 0
      %586 = vmatpush.msra.mxu0 0.0
      %587 = vmatpush.msra.mxu0 0.0
      %588 = vmatpush.msra.mxu0 0.0
      %589 = vmatpush.msra.mxu0 0.0
      %590 = vmatpush.msra.mxu0 0.0
      %591 = vmatpush.msra.mxu0 0.0
      %592 = vmatpush.msra.mxu0 0.0
      %593 = vmatpush.msra.mxu0 0.0
      %594 = vmatpush.msra.mxu0 0.0
      %595 = vmatpush.msra.mxu0 0.0
      %596 = vmatpush.msra.mxu0 0.0
      %597 = vmatpush.msra.mxu0 0.0
      %598 = vmatpush.msra.mxu0 0.0
      %599 = vmatpush.msra.mxu0 0.0
      %600 = vmatpush.msra.mxu0 0.0
      %601 = vmatpush.msra.mxu0 %v582
      %602 = vmatmul.f32.gmra.mxu0 %v573
      %v603 = vpop.f32.mrf.mxu0
      %v604 = vadd.f32 0.0, %v603
      %605 = vmatmul.f32.gmra.mxu0 %v576
      %v606 = vpop.f32.mrf.mxu0
      %v607 = vadd.f32 0.0, %v606
      %608 = vmatmul.f32.gmra.mxu0 %v579
      %v609 = vpop.f32.mrf.mxu0
      %v610 = vadd.f32 0.0, %v609
      %611 = vdwg.mxu0
      %612 = vmatpush.msra.mxu0 0.0
      %613 = vmatpush.msra.mxu0 0.0
      %614 = vmatpush.msra.mxu0 0.0
      %615 = vmatpush.msra.mxu0 0.0
      %616 = vmatpush.msra.mxu0 0.0
      %617 = vmatpush.msra.mxu0 0.0
      %618 = vmatpush.msra.mxu0 0.0
      %619 = vmatpush.msra.mxu0 0.0
      %620 = vmatpush.msra.mxu0 0.0
      %621 = vmatpush.msra.mxu0 0.0
      %622 = vmatpush.msra.mxu0 0.0
      %623 = vmatpush.msra.mxu0 0.0
      %624 = vmatpush.msra.mxu0 0.0
      %625 = vmatpush.msra.mxu0 0.0
      %626 = vmatpush.msra.mxu0 0.0
      %627 = vmatpush.msra.mxu0 %v584
      %628 = vmatmul.f32.gmra.mxu0 %v573
      %v629 = vpop.f32.mrf.mxu0
      %v630 = vadd.f32 0.0, %v629
      %631 = vmatmul.f32.gmra.mxu0 %v576
      %v632 = vpop.f32.mrf.mxu0
      %v633 = vadd.f32 0.0, %v632
      %634 = vmatmul.f32.gmra.mxu0 %v579
      %v635 = vpop.f32.mrf.mxu0
      %v636 = vadd.f32 0.0, %v635
      %637 = vdwg.mxu0
      %v638 = vmax.f32 %v604, 0.0
      %v639 = vmax.f32 %v630, 0.0
      %v640 = vxor.u32 %v607, 2147483648
      %v641 = vxor.u32 %v633, 2147483648
      %v642 = vmul.f32 %v640, 1.442695
      %v643 = vpow.pop %v642
      %v644 = vmul.f32 %v641, 1.442695
      %v645 = vpow.pop %v644
      %v646 = vadd.f32 %v643, 1.0
      %v647 = vadd.f32 %v645, 1.0
      %v648 = vrcp.pop %v646
      %v649 = vmul.f32 %v646, %v648
      %v650 = vsub.f32 1.0, %v649
      %v651 = vmul.f32 %v648, %v650
      %v652 = vadd.f32 %v648, %v651
      %vm653 = vweird.f32 %v646
      %vm654 = vweird.f32 %v648
      %vm655 = vmor %vm653, %vm654
      %v656 = vsel %vm655, %v648, %v652
      %v657 = vand.u32 2147483647, %v646
      %vm658 = vcmp.eq.f32.partialorder %v657, 8.507059e+37
      %v659 = vand.u32 %v646, 2147483648
      %v660 = vor.u32 1.1754944e-38, %v659
      %v661 = vsel %vm658, %v660, %v656
      %v662 = vmul.f32 1.0, %v661
      %v663 = vrcp.pop %v647
      %v664 = vmul.f32 %v647, %v663
      %v665 = vsub.f32 1.0, %v664
      %v666 = vmul.f32 %v663, %v665
      %v667 = vadd.f32 %v663, %v666
      %vm668 = vweird.f32 %v647
      %vm669 = vweird.f32 %v663
      %vm670 = vmor %vm668, %vm669
      %v671 = vsel %vm670, %v663, %v667
      %v672 = vand.u32 2147483647, %v647
      %vm673 = vcmp.eq.f32.partialorder %v672, 8.507059e+37
      %v674 = vand.u32 %v647, 2147483648
      %v675 = vor.u32 1.1754944e-38, %v674
      %v676 = vsel %vm673, %v675, %v671
      %v677 = vmul.f32 1.0, %v676
      %v678 = vsub.f32 1.0, %v662
      %v679 = vsub.f32 1.0, %v677
      %v680 = vxor.u32 %v610, 2147483648
      %v681 = vxor.u32 %v636, 2147483648
      %v682 = vmul.f32 %v680, 1.442695
      %v683 = vpow.pop %v682
      %v684 = vmul.f32 %v681, 1.442695
      %v685 = vpow.pop %v684
      %v686 = vadd.f32 %v683, 1.0
      %v687 = vadd.f32 %v685, 1.0
      %v688 = vrcp.pop %v686
      %v689 = vmul.f32 %v686, %v688
      %v690 = vsub.f32 1.0, %v689
      %v691 = vmul.f32 %v688, %v690
      %v692 = vadd.f32 %v688, %v691
      %vm693 = vweird.f32 %v686
      %vm694 = vweird.f32 %v688
      %vm695 = vmor %vm693, %vm694
      %v696 = vsel %vm695, %v688, %v692
      %v697 = vand.u32 2147483647, %v686
      %vm698 = vcmp.eq.f32.partialorder %v697, 8.507059e+37
      %v699 = vand.u32 %v686, 2147483648
      %v700 = vor.u32 1.1754944e-38, %v699
      %v701 = vsel %vm698, %v700, %v696
      %v702 = vmul.f32 1.0, %v701
      %v703 = vrcp.pop %v687
      %v704 = vmul.f32 %v687, %v703
      %v705 = vsub.f32 1.0, %v704
      %v706 = vmul.f32 %v703, %v705
      %v707 = vadd.f32 %v703, %v706
      %vm708 = vweird.f32 %v687
      %vm709 = vweird.f32 %v703
      %vm710 = vmor %vm708, %vm709
      %v711 = vsel %vm710, %v703, %v707
      %v712 = vand.u32 2147483647, %v687
      %vm713 = vcmp.eq.f32.partialorder %v712, 8.507059e+37
      %v714 = vand.u32 %v687, 2147483648
      %v715 = vor.u32 1.1754944e-38, %v714
      %v716 = vsel %vm713, %v715, %v711
      %v717 = vmul.f32 1.0, %v716
      %v718 = vsub.f32 1.0, %v702
      %v719 = vsub.f32 1.0, %v717
      %v720 = vld [vmem:[%s4] sm:$0xff]
      %v721 = vld [vmem:[%s4 + $0x8] sm:$0x3]
      %vm722 = vcmask 64512
      %v724 = vsel %vm722, %v720, 0
      %v727 = vsel %vm722, %v721, 0
      %729 = vmatpush.msra.mxu0 0.0
      %730 = vmatpush.msra.mxu0 0.0
      %731 = vmatpush.msra.mxu0 0.0
      %732 = vmatpush.msra.mxu0 0.0
      %733 = vmatpush.msra.mxu0 0.0
      %734 = vmatpush.msra.mxu0 0.0
      %735 = vmatpush.msra.mxu0 0.0
      %736 = vmatpush.msra.mxu0 0.0
      %737 = vmatpush.msra.mxu0 0.0
      %738 = vmatpush.msra.mxu0 0.0
      %739 = vmatpush.msra.mxu0 0.0
      %740 = vmatpush.msra.mxu0 0.0
      %741 = vmatpush.msra.mxu0 0.0
      %742 = vmatpush.msra.mxu0 0.0
      %743 = vmatpush.msra.mxu0 0.0
      %744 = vmatpush.msra.mxu0 %v638
      %745 = vmatmul.f32.gmra.mxu0 %v724
      %v746 = vpop.f32.mrf.mxu0
      %v747 = vadd.f32 0.0, %v746
      %748 = vmatmul.f32.gmra.mxu0 %v727
      %v749 = vpop.f32.mrf.mxu0
      %v750 = vadd.f32 0.0, %v749
      %751 = vdwg.mxu0
      %752 = vmatpush.msra.mxu0 0.0
      %753 = vmatpush.msra.mxu0 0.0
      %754 = vmatpush.msra.mxu0 0.0
      %755 = vmatpush.msra.mxu0 0.0
      %756 = vmatpush.msra.mxu0 0.0
      %757 = vmatpush.msra.mxu0 0.0
      %758 = vmatpush.msra.mxu0 0.0
      %759 = vmatpush.msra.mxu0 0.0
      %760 = vmatpush.msra.mxu0 0.0
      %761 = vmatpush.msra.mxu0 0.0
      %762 = vmatpush.msra.mxu0 0.0
      %763 = vmatpush.msra.mxu0 0.0
      %764 = vmatpush.msra.mxu0 0.0
      %765 = vmatpush.msra.mxu0 0.0
      %766 = vmatpush.msra.mxu0 0.0
      %767 = vmatpush.msra.mxu0 %v639
      %768 = vmatmul.f32.gmra.mxu0 %v724
      %v769 = vpop.f32.mrf.mxu0
      %v770 = vadd.f32 0.0, %v769
      %771 = vmatmul.f32.gmra.mxu0 %v727
      %v772 = vpop.f32.mrf.mxu0
      %v773 = vadd.f32 0.0, %v772
      %774 = vdwg.mxu0
      %v775 = vld [vmem:[%s5] sm:$0xf]
      %v776 = vld [vmem:[%s5 + $0x4] sm:$0xf]
      %v777 = vld [vmem:[%s5 + $0x8] sm:$0xf]
      %v778 = vld [vmem:[%s5 + $0xc] sm:$0xf]
      %v783 = vunpack.c.l.b16 %v775
      %v784 = vunpack.c.l.b16 %v776
      %v785 = vunpack.c.l.b16 %v777
      %v786 = vunpack.c.l.b16 %v778
      %v787 = vpack.c.b16 %v784, %v783
      %v788 = vpack.c.b16 %v786, %v785
      %v791 = vunpack.c.l.b16 %v554
      %v792 = vunpack.c.h.b16 %v554
      %v793 = vunpack.c.l.b16 %v555
      %v794 = vunpack.c.h.b16 %v555
      %v795 = vpack.c.b16 %v793, %v791
      %v796 = vpack.c.b16 %v794, %v792
      %vm799 = vcmask 130048
      %v801 = vsel %vm799, %v787, 0
      %v804 = vsel %vm799, %v788, 0
      %806 = vmatpush.bf16.msra.mxu0 0
      %807 = vmatpush.bf16.msra.mxu0 0
      %808 = vmatpush.bf16.msra.mxu0 0
      %809 = vmatpush.bf16.msra.mxu0 0
      %810 = vmatpush.bf16.msra.mxu0 0
      %811 = vmatpush.bf16.msra.mxu0 0
      %812 = vmatpush.bf16.msra.mxu0 0
      %813 = vmatpush.bf16.msra.mxu0 %v795
      %814 = vmatmul.bf16.gmra.mxu0 %v801
      %v815 = vpop.f32.mrf.mxu0
      %v816 = vadd.f32 0.0, %v815
      %v817 = vpop.f32.mrf.mxu0
      %v818 = vadd.f32 0.0, %v817
      %819 = vmatmul.bf16.gmra.mxu0 %v804
      %v820 = vpop.f32.mrf.mxu0
      %v821 = vadd.f32 0.0, %v820
      %v822 = vpop.f32.mrf.mxu0
      %v823 = vadd.f32 0.0, %v822
      %824 = vdwg.mxu0
      %825 = vmatpush.bf16.msra.mxu0 0
      %826 = vmatpush.bf16.msra.mxu0 0
      %827 = vmatpush.bf16.msra.mxu0 0
      %828 = vmatpush.bf16.msra.mxu0 0
      %829 = vmatpush.bf16.msra.mxu0 0
      %830 = vmatpush.bf16.msra.mxu0 0
      %831 = vmatpush.bf16.msra.mxu0 0
      %832 = vmatpush.bf16.msra.mxu0 %v796
      %833 = vmatmul.bf16.gmra.mxu0 %v801
      %v834 = vpop.f32.mrf.mxu0
      %v835 = vadd.f32 0.0, %v834
      %v836 = vpop.f32.mrf.mxu0
      %v837 = vadd.f32 0.0, %v836
      %838 = vmatmul.bf16.gmra.mxu0 %v804
      %v839 = vpop.f32.mrf.mxu0
      %v840 = vadd.f32 0.0, %v839
      %v841 = vpop.f32.mrf.mxu0
      %v842 = vadd.f32 0.0, %v841
      %843 = vdwg.mxu0
      %v844 = vmax.f32 %v816, 0.0
      %v845 = vmax.f32 %v835, 0.0
      %v846 = vmax.f32 %v818, 0.0
      %v847 = vmax.f32 %v837, 0.0
      %v848 = vmax.f32 %v821, 0.0
      %v849 = vmax.f32 %v840, 0.0
      %v850 = vmax.f32 %v823, 0.0
      %v851 = vmax.f32 %v842, 0.0
      %v852 = vld [vmem:[%s6] sm:$0xf]
      %vm853 = vcmask 261120
      %v855 = vsel %vm853, %v852, 0
      %857 = vmatpush.msra.mxu0 0.0
      %858 = vmatpush.msra.mxu0 0.0
      %859 = vmatpush.msra.mxu0 0.0
      %860 = vmatpush.msra.mxu0 0.0
      %861 = vmatpush.msra.mxu0 0.0
      %862 = vmatpush.msra.mxu0 0.0
      %863 = vmatpush.msra.mxu0 0.0
      %864 = vmatpush.msra.mxu0 0.0
      %865 = vmatpush.msra.mxu0 0.0
      %866 = vmatpush.msra.mxu0 0.0
      %867 = vmatpush.msra.mxu0 0.0
      %868 = vmatpush.msra.mxu0 0.0
      %869 = vmatpush.msra.mxu0 %v850
      %870 = vmatpush.msra.mxu0 %v848
      %871 = vmatpush.msra.mxu0 %v846
      %872 = vmatpush.msra.mxu0 %v844
      %873 = vmatmul.f32.gmra.mxu0 %v855
      %v874 = vpop.f32.mrf.mxu0
      %v875 = vadd.f32 0.0, %v874
      %876 = vdwg.mxu0
      %877 = vmatpush.msra.mxu0 0.0
      %878 = vmatpush.msra.mxu0 0.0
      %879 = vmatpush.msra.mxu0 0.0
      %880 = vmatpush.msra.mxu0 0.0
      %881 = vmatpush.msra.mxu0 0.0
      %882 = vmatpush.msra.mxu0 0.0
      %883 = vmatpush.msra.mxu0 0.0
      %884 = vmatpush.msra.mxu0 0.0
      %885 = vmatpush.msra.mxu0 0.0
      %886 = vmatpush.msra.mxu0 0.0
      %887 = vmatpush.msra.mxu0 0.0
      %888 = vmatpush.msra.mxu0 0.0
      %889 = vmatpush.msra.mxu0 %v851
      %890 = vmatpush.msra.mxu0 %v849
      %891 = vmatpush.msra.mxu0 %v847
      %892 = vmatpush.msra.mxu0 %v845
      %893 = vmatmul.f32.gmra.mxu0 %v855
      %v894 = vpop.f32.mrf.mxu0
      %v895 = vadd.f32 0.0, %v894
      %896 = vdwg.mxu0
      %v897 = vperm.slane %v750, 0
      %v898 = vperm.slane %v773, 0
      %v899 = vadd.f32 %v897, %v875
      %v900 = vadd.f32 %v898, %v895
      %v901 = vmax.f32 %v899, 0.0
      %v902 = vmax.f32 %v900, 0.0
      %v903 = vsel %vm581, %v901, -inf
      %v904 = vrot.slane %v903, 4
      %v905 = vmax.f32 %v903, %v904
      %v906 = vrot.slane %v905, 2
      %v907 = vmax.f32 %v905, %v906
      %v908 = vrot.slane %v907, 1
      %v909 = vmax.f32 %v907, %v908
      %v910 = vsel %vm581, %v902, -inf
      %v911 = vrot.slane %v910, 4
      %v912 = vmax.f32 %v910, %v911
      %v913 = vrot.slane %v912, 2
      %v914 = vmax.f32 %v912, %v913
      %v915 = vrot.slane %v914, 1
      %v916 = vmax.f32 %v914, %v915
      %v917 = vsub.f32 %v901, %v909
      %v918 = vsub.f32 %v902, %v916
      %v919 = vmul.f32 %v917, 1.442695
      %v920 = vpow.pop %v919
      %v921 = vmul.f32 %v918, 1.442695
      %v922 = vpow.pop %v921
      %v923 = vsel %vm581, %v920, 0.0
      %v924 = vrot.slane %v923, 4
      %v925 = vadd.f32 %v923, %v924
      %v926 = vrot.slane %v925, 2
      %v927 = vadd.f32 %v925, %v926
      %v928 = vrot.slane %v927, 1
      %v929 = vadd.f32 %v927, %v928
      %v930 = vsel %vm581, %v922, 0.0
      %v931 = vrot.slane %v930, 4
      %v932 = vadd.f32 %v930, %v931
      %v933 = vrot.slane %v932, 2
      %v934 = vadd.f32 %v932, %v933
      %v935 = vrot.slane %v934, 1
      %v936 = vadd.f32 %v934, %v935
      %v937 = vrcp.pop %v929
      %v938 = vrcp.pop %v936
      %v939 = vmul.f32 %v920, %v937
      %v940 = vmul.f32 %v922, %v938
      %v943 = vrot.slane %v940, 7
      %vm944 = vcmask 1040384
      %v945 = vsel %vm944, %v939, %v943
      %vm946 = vcmask 1041409
      %v947 = vsel %vm946, %v939, %v943
      %v948 = vrot.slane %v947, 1
      %vm949 = vcmask 1042434
      %v950 = vsel %vm949, %v939, %v943
      %v951 = vrot.slane %v950, 2
      %vm952 = vcmask 1043459
      %v953 = vsel %vm952, %v939, %v943
      %v954 = vrot.slane %v953, 3
      %v955 = vperm.slane %v945, 0
      %v956 = vperm.slane %v945, 1
      %v957 = vperm.slane %v948, 0
      %v958 = vperm.slane %v948, 1
      %v959 = vperm.slane %v951, 0
      %v960 = vperm.slane %v951, 1
      %v961 = vperm.slane %v954, 0
      %v962 = vperm.slane %v954, 1
      %v971 = vmul.f32 %v844, %v955
      %v972 = vmul.f32 %v845, %v956
      %v973 = vmul.f32 %v846, %v957
      %v974 = vmul.f32 %v847, %v958
      %v975 = vmul.f32 %v848, %v959
      %v976 = vmul.f32 %v849, %v960
      %v977 = vmul.f32 %v850, %v961
      %v978 = vmul.f32 %v851, %v962
      %v979 = vadd.f32 %v971, %v973
      %v980 = vadd.f32 %v979, %v975
      %v981 = vadd.f32 %v980, %v977
      %v982 = vadd.f32 %v972, %v974
      %v983 = vadd.f32 %v982, %v976
      %v984 = vadd.f32 %v983, %v978
      %v985 = vld [vmem:[%s7] sm:$0xff]
      %v987 = vsel %vm722, %v985, 0
      %989 = vmatpush.msra.mxu0 0.0
      %990 = vmatpush.msra.mxu0 0.0
      %991 = vmatpush.msra.mxu0 0.0
      %992 = vmatpush.msra.mxu0 0.0
      %993 = vmatpush.msra.mxu0 0.0
      %994 = vmatpush.msra.mxu0 0.0
      %995 = vmatpush.msra.mxu0 0.0
      %996 = vmatpush.msra.mxu0 0.0
      %997 = vmatpush.msra.mxu0 0.0
      %998 = vmatpush.msra.mxu0 0.0
      %999 = vmatpush.msra.mxu0 0.0
      %1000 = vmatpush.msra.mxu0 0.0
      %1001 = vmatpush.msra.mxu0 0.0
      %1002 = vmatpush.msra.mxu0 0.0
      %1003 = vmatpush.msra.mxu0 0.0
      %1004 = vmatpush.msra.mxu0 %v981
      %1005 = vmatmul.f32.gmra.mxu0 %v987
      %v1006 = vpop.f32.mrf.mxu0
      %v1007 = vadd.f32 0.0, %v1006
      %1008 = vdwg.mxu0
      %1009 = vmatpush.msra.mxu0 0.0
      %1010 = vmatpush.msra.mxu0 0.0
      %1011 = vmatpush.msra.mxu0 0.0
      %1012 = vmatpush.msra.mxu0 0.0
      %1013 = vmatpush.msra.mxu0 0.0
      %1014 = vmatpush.msra.mxu0 0.0
      %1015 = vmatpush.msra.mxu0 0.0
      %1016 = vmatpush.msra.mxu0 0.0
      %1017 = vmatpush.msra.mxu0 0.0
      %1018 = vmatpush.msra.mxu0 0.0
      %1019 = vmatpush.msra.mxu0 0.0
      %1020 = vmatpush.msra.mxu0 0.0
      %1021 = vmatpush.msra.mxu0 0.0
      %1022 = vmatpush.msra.mxu0 0.0
      %1023 = vmatpush.msra.mxu0 0.0
      %1024 = vmatpush.msra.mxu0 %v984
      %1025 = vmatmul.f32.gmra.mxu0 %v987
      %v1026 = vpop.f32.mrf.mxu0
      %v1027 = vadd.f32 0.0, %v1026
      %1028 = vdwg.mxu0
      %v1029 = vmul.f32 %v1007, %v678
      %v1030 = vmul.f32 %v1027, %v679
      %v1031 = vld [vmem:[%s8] sm:$0xf]
      %v1032 = vld [vmem:[%s8 + $0x4] sm:$0xf]
      %v1033 = vld [vmem:[%s8 + $0x8] sm:$0xf]
      %v1034 = vld [vmem:[%s8 + $0xc] sm:$0xf]
      %v1035 = vld [vmem:[%s8 + $0x10] sm:$0xf]
      %v1036 = vld [vmem:[%s8 + $0x14] sm:$0xf]
      %v1037 = vld [vmem:[%s8 + $0x18] sm:$0xf]
      %v1038 = vld [vmem:[%s8 + $0x1c] sm:$0xf]
      %v1039 = vld [vmem:[%s8 + $0x20] sm:$0xf]
      %v1040 = vld [vmem:[%s8 + $0x24] sm:$0xf]
      %v1041 = vld [vmem:[%s8 + $0x28] sm:$0xf]
      %v1042 = vld [vmem:[%s8 + $0x2c] sm:$0xf]
      %v1043 = vld [vmem:[%s8 + $0x30] sm:$0xf]
      %v1044 = vld [vmem:[%s8 + $0x34] sm:$0xf]
      %v1045 = vld [vmem:[%s8 + $0x38] sm:$0xf]
      %v1046 = vld [vmem:[%s8 + $0x3c] sm:$0xf]
      %v1063 = vunpack.c.l.b16 %v1031
      %v1064 = vunpack.c.l.b16 %v1032
      %v1065 = vunpack.c.l.b16 %v1033
      %v1066 = vunpack.c.l.b16 %v1034
      %v1067 = vunpack.c.l.b16 %v1035
      %v1068 = vunpack.c.l.b16 %v1036
      %v1069 = vunpack.c.l.b16 %v1037
      %v1070 = vunpack.c.l.b16 %v1038
      %v1071 = vunpack.c.l.b16 %v1039
      %v1072 = vunpack.c.l.b16 %v1040
      %v1073 = vunpack.c.l.b16 %v1041
      %v1074 = vunpack.c.l.b16 %v1042
      %v1075 = vunpack.c.l.b16 %v1043
      %v1076 = vunpack.c.l.b16 %v1044
      %v1077 = vunpack.c.l.b16 %v1045
      %v1078 = vunpack.c.l.b16 %v1046
      %v1079 = vpack.c.b16 %v1064, %v1063
      %v1080 = vpack.c.b16 %v1066, %v1065
      %v1081 = vpack.c.b16 %v1068, %v1067
      %v1082 = vpack.c.b16 %v1070, %v1069
      %v1083 = vpack.c.b16 %v1072, %v1071
      %v1084 = vpack.c.b16 %v1074, %v1073
      %v1085 = vpack.c.b16 %v1076, %v1075
      %v1086 = vpack.c.b16 %v1078, %v1077
      %v1095 = vunpack.c.l.b16 %v556
      %v1096 = vunpack.c.h.b16 %v556
      %v1097 = vunpack.c.l.b16 %v557
      %v1098 = vunpack.c.h.b16 %v557
      %v1099 = vunpack.c.l.b16 %v558
      %v1100 = vunpack.c.h.b16 %v558
      %v1101 = vunpack.c.l.b16 %v559
      %v1102 = vunpack.c.h.b16 %v559
      %v1103 = vunpack.c.l.b16 %v560
      %v1104 = vunpack.c.h.b16 %v560
      %v1105 = vunpack.c.l.b16 %v561
      %v1106 = vunpack.c.h.b16 %v561
      %v1107 = vunpack.c.l.b16 %v562
      %v1108 = vunpack.c.h.b16 %v562
      %v1109 = vunpack.c.l.b16 %v563
      %v1110 = vunpack.c.h.b16 %v563
      %v1111 = vpack.c.b16 %v1097, %v1095
      %v1112 = vpack.c.b16 %v1098, %v1096
      %v1113 = vpack.c.b16 %v1101, %v1099
      %v1114 = vpack.c.b16 %v1102, %v1100
      %v1115 = vpack.c.b16 %v1105, %v1103
      %v1116 = vpack.c.b16 %v1106, %v1104
      %v1117 = vpack.c.b16 %v1109, %v1107
      %v1118 = vpack.c.b16 %v1110, %v1108
      %vm1127 = vcmask 523264
      %v1129 = vsel %vm1127, %v1079, 0
      %v1132 = vsel %vm1127, %v1080, 0
      %v1135 = vsel %vm1127, %v1081, 0
      %v1138 = vsel %vm1127, %v1082, 0
      %v1141 = vsel %vm1127, %v1083, 0
      %v1144 = vsel %vm1127, %v1084, 0
      %v1147 = vsel %vm1127, %v1085, 0
      %v1150 = vsel %vm1127, %v1086, 0
      %1152 = vmatpush.bf16.msra.mxu0 0
      %1153 = vmatpush.bf16.msra.mxu0 0
      %1154 = vmatpush.bf16.msra.mxu0 0
      %1155 = vmatpush.bf16.msra.mxu0 0
      %1156 = vmatpush.bf16.msra.mxu0 %v1117
      %1157 = vmatpush.bf16.msra.mxu0 %v1115
      %1158 = vmatpush.bf16.msra.mxu0 %v1113
      %1159 = vmatpush.bf16.msra.mxu0 %v1111
      %1160 = vmatmul.bf16.gmra.mxu0 %v1129
      %v1161 = vpop.f32.mrf.mxu0
      %v1162 = vadd.f32 0.0, %v1161
      %v1163 = vpop.f32.mrf.mxu0
      %v1164 = vadd.f32 0.0, %v1163
      %1165 = vmatmul.bf16.gmra.mxu0 %v1132
      %v1166 = vpop.f32.mrf.mxu0
      %v1167 = vadd.f32 0.0, %v1166
      %v1168 = vpop.f32.mrf.mxu0
      %v1169 = vadd.f32 0.0, %v1168
      %1170 = vmatmul.bf16.gmra.mxu0 %v1135
      %v1171 = vpop.f32.mrf.mxu0
      %v1172 = vadd.f32 0.0, %v1171
      %v1173 = vpop.f32.mrf.mxu0
      %v1174 = vadd.f32 0.0, %v1173
      %1175 = vmatmul.bf16.gmra.mxu0 %v1138
      %v1176 = vpop.f32.mrf.mxu0
      %v1177 = vadd.f32 0.0, %v1176
      %v1178 = vpop.f32.mrf.mxu0
      %v1179 = vadd.f32 0.0, %v1178
      %1180 = vmatmul.bf16.gmra.mxu0 %v1141
      %v1181 = vpop.f32.mrf.mxu0
      %v1182 = vadd.f32 0.0, %v1181
      %v1183 = vpop.f32.mrf.mxu0
      %v1184 = vadd.f32 0.0, %v1183
      %1185 = vmatmul.bf16.gmra.mxu0 %v1144
      %v1186 = vpop.f32.mrf.mxu0
      %v1187 = vadd.f32 0.0, %v1186
      %v1188 = vpop.f32.mrf.mxu0
      %v1189 = vadd.f32 0.0, %v1188
      %1190 = vmatmul.bf16.gmra.mxu0 %v1147
      %v1191 = vpop.f32.mrf.mxu0
      %v1192 = vadd.f32 0.0, %v1191
      %v1193 = vpop.f32.mrf.mxu0
      %v1194 = vadd.f32 0.0, %v1193
      %1195 = vmatmul.bf16.gmra.mxu0 %v1150
      %v1196 = vpop.f32.mrf.mxu0
      %v1197 = vadd.f32 0.0, %v1196
      %v1198 = vpop.f32.mrf.mxu0
      %v1199 = vadd.f32 0.0, %v1198
      %1200 = vdwg.mxu0
      %1201 = vmatpush.bf16.msra.mxu0 0
      %1202 = vmatpush.bf16.msra.mxu0 0
      %1203 = vmatpush.bf16.msra.mxu0 0
      %1204 = vmatpush.bf16.msra.mxu0 0
      %1205 = vmatpush.bf16.msra.mxu0 %v1118
      %1206 = vmatpush.bf16.msra.mxu0 %v1116
      %1207 = vmatpush.bf16.msra.mxu0 %v1114
      %1208 = vmatpush.bf16.msra.mxu0 %v1112
      %1209 = vmatmul.bf16.gmra.mxu0 %v1129
      %v1210 = vpop.f32.mrf.mxu0
      %v1211 = vadd.f32 0.0, %v1210
      %v1212 = vpop.f32.mrf.mxu0
      %v1213 = vadd.f32 0.0, %v1212
      %1214 = vmatmul.bf16.gmra.mxu0 %v1132
      %v1215 = vpop.f32.mrf.mxu0
      %v1216 = vadd.f32 0.0, %v1215
      %v1217 = vpop.f32.mrf.mxu0
      %v1218 = vadd.f32 0.0, %v1217
      %1219 = vmatmul.bf16.gmra.mxu0 %v1135
      %v1220 = vpop.f32.mrf.mxu0
      %v1221 = vadd.f32 0.0, %v1220
      %v1222 = vpop.f32.mrf.mxu0
      %v1223 = vadd.f32 0.0, %v1222
      %1224 = vmatmul.bf16.gmra.mxu0 %v1138
      %v1225 = vpop.f32.mrf.mxu0
      %v1226 = vadd.f32 0.0, %v1225
      %v1227 = vpop.f32.mrf.mxu0
      %v1228 = vadd.f32 0.0, %v1227
      %1229 = vmatmul.bf16.gmra.mxu0 %v1141
      %v1230 = vpop.f32.mrf.mxu0
      %v1231 = vadd.f32 0.0, %v1230
      %v1232 = vpop.f32.mrf.mxu0
      %v1233 = vadd.f32 0.0, %v1232
      %1234 = vmatmul.bf16.gmra.mxu0 %v1144
      %v1235 = vpop.f32.mrf.mxu0
      %v1236 = vadd.f32 0.0, %v1235
      %v1237 = vpop.f32.mrf.mxu0
      %v1238 = vadd.f32 0.0, %v1237
      %1239 = vmatmul.bf16.gmra.mxu0 %v1147
      %v1240 = vpop.f32.mrf.mxu0
      %v1241 = vadd.f32 0.0, %v1240
      %v1242 = vpop.f32.mrf.mxu0
      %v1243 = vadd.f32 0.0, %v1242
      %1244 = vmatmul.bf16.gmra.mxu0 %v1150
      %v1245 = vpop.f32.mrf.mxu0
      %v1246 = vadd.f32 0.0, %v1245
      %v1247 = vpop.f32.mrf.mxu0
      %v1248 = vadd.f32 0.0, %v1247
      %1249 = vdwg.mxu0
      %v1250 = vmax.f32 %v1162, 0.0
      %v1251 = vmax.f32 %v1211, 0.0
      %v1252 = vmax.f32 %v1164, 0.0
      %v1253 = vmax.f32 %v1213, 0.0
      %v1254 = vmax.f32 %v1167, 0.0
      %v1255 = vmax.f32 %v1216, 0.0
      %v1256 = vmax.f32 %v1169, 0.0
      %v1257 = vmax.f32 %v1218, 0.0
      %v1258 = vmax.f32 %v1172, 0.0
      %v1259 = vmax.f32 %v1221, 0.0
      %v1260 = vmax.f32 %v1174, 0.0
      %v1261 = vmax.f32 %v1223, 0.0
      %v1262 = vmax.f32 %v1177, 0.0
      %v1263 = vmax.f32 %v1226, 0.0
      %v1264 = vmax.f32 %v1179, 0.0
      %v1265 = vmax.f32 %v1228, 0.0
      %v1266 = vmax.f32 %v1182, 0.0
      %v1267 = vmax.f32 %v1231, 0.0
      %v1268 = vmax.f32 %v1184, 0.0
      %v1269 = vmax.f32 %v1233, 0.0
      %v1270 = vmax.f32 %v1187, 0.0
      %v1271 = vmax.f32 %v1236, 0.0
      %v1272 = vmax.f32 %v1189, 0.0
      %v1273 = vmax.f32 %v1238, 0.0
      %v1274 = vmax.f32 %v1192, 0.0
      %v1275 = vmax.f32 %v1241, 0.0
      %v1276 = vmax.f32 %v1194, 0.0
      %v1277 = vmax.f32 %v1243, 0.0
      %v1278 = vmax.f32 %v1197, 0.0
      %v1279 = vmax.f32 %v1246, 0.0
      %v1280 = vmax.f32 %v1199, 0.0
      %v1281 = vmax.f32 %v1248, 0.0
      %v1282 = vld [vmem:[%s9] sm:$0xff]
      %v1283 = vld [vmem:[%s9 + $0x8] sm:$0xff]
      %1284 = vmatpush.msra.mxu0 %v1280
      %1285 = vmatpush.msra.mxu0 %v1278
      %1286 = vmatpush.msra.mxu0 %v1276
      %1287 = vmatpush.msra.mxu0 %v1274
      %1288 = vmatpush.msra.mxu0 %v1272
      %1289 = vmatpush.msra.mxu0 %v1270
      %1290 = vmatpush.msra.mxu0 %v1268
      %1291 = vmatpush.msra.mxu0 %v1266
      %1292 = vmatpush.msra.mxu0 %v1264
      %1293 = vmatpush.msra.mxu0 %v1262
      %1294 = vmatpush.msra.mxu0 %v1260
      %1295 = vmatpush.msra.mxu0 %v1258
      %1296 = vmatpush.msra.mxu0 %v1256
      %1297 = vmatpush.msra.mxu0 %v1254
      %1298 = vmatpush.msra.mxu0 %v1252
      %1299 = vmatpush.msra.mxu0 %v1250
      %1300 = vmatmul.f32.gmra.mxu0 %v1282
      %v1301 = vpop.f32.mrf.mxu0
      %v1302 = vadd.f32 0.0, %v1301
      %1303 = vmatmul.f32.gmra.mxu0 %v1283
      %v1304 = vpop.f32.mrf.mxu0
      %v1305 = vadd.f32 0.0, %v1304
      %1306 = vdwg.mxu0
      %1307 = vmatpush.msra.mxu0 %v1281
      %1308 = vmatpush.msra.mxu0 %v1279
      %1309 = vmatpush.msra.mxu0 %v1277
      %1310 = vmatpush.msra.mxu0 %v1275
      %1311 = vmatpush.msra.mxu0 %v1273
      %1312 = vmatpush.msra.mxu0 %v1271
      %1313 = vmatpush.msra.mxu0 %v1269
      %1314 = vmatpush.msra.mxu0 %v1267
      %1315 = vmatpush.msra.mxu0 %v1265
      %1316 = vmatpush.msra.mxu0 %v1263
      %1317 = vmatpush.msra.mxu0 %v1261
      %1318 = vmatpush.msra.mxu0 %v1259
      %1319 = vmatpush.msra.mxu0 %v1257
      %1320 = vmatpush.msra.mxu0 %v1255
      %1321 = vmatpush.msra.mxu0 %v1253
      %1322 = vmatpush.msra.mxu0 %v1251
      %1323 = vmatmul.f32.gmra.mxu0 %v1282
      %v1324 = vpop.f32.mrf.mxu0
      %v1325 = vadd.f32 0.0, %v1324
      %1326 = vmatmul.f32.gmra.mxu0 %v1283
      %v1327 = vpop.f32.mrf.mxu0
      %v1328 = vadd.f32 0.0, %v1327
      %1329 = vdwg.mxu0
      %v1330 = vperm.slane %v750, 1
      %v1331 = vperm.slane %v773, 1
      %v1332 = vadd.f32 %v1330, %v1302
      %v1333 = vadd.f32 %v1331, %v1325
      %v1334 = vadd.f32 %v1330, %v1305
      %v1335 = vadd.f32 %v1331, %v1328
      %v1336 = vmax.f32 %v1332, 0.0
      %v1337 = vmax.f32 %v1333, 0.0
      %v1338 = vmax.f32 %v1334, 0.0
      %v1339 = vmax.f32 %v1335, 0.0
      %v1340 = vmax.f32 %v1336, %v1338
      %v1341 = vrot.slane %v1340, 4
      %v1342 = vmax.f32 %v1340, %v1341
      %v1343 = vrot.slane %v1342, 2
      %v1344 = vmax.f32 %v1342, %v1343
      %v1345 = vrot.slane %v1344, 1
      %v1346 = vmax.f32 %v1344, %v1345
      %v1347 = vmax.f32 %v1337, %v1339
      %v1348 = vrot.slane %v1347, 4
      %v1349 = vmax.f32 %v1347, %v1348
      %v1350 = vrot.slane %v1349, 2
      %v1351 = vmax.f32 %v1349, %v1350
      %v1352 = vrot.slane %v1351, 1
      %v1353 = vmax.f32 %v1351, %v1352
      %v1354 = vsub.f32 %v1336, %v1346
      %v1355 = vsub.f32 %v1337, %v1353
      %v1356 = vsub.f32 %v1338, %v1346
      %v1357 = vsub.f32 %v1339, %v1353
      %v1358 = vmul.f32 %v1354, 1.442695
      %v1359 = vpow.pop %v1358
      %v1360 = vmul.f32 %v1355, 1.442695
      %v1361 = vpow.pop %v1360
      %v1362 = vmul.f32 %v1356, 1.442695
      %v1363 = vpow.pop %v1362
      %v1364 = vmul.f32 %v1357, 1.442695
      %v1365 = vpow.pop %v1364
      %v1366 = vadd.f32 %v1359, %v1363
      %v1367 = vrot.slane %v1366, 4
      %v1368 = vadd.f32 %v1366, %v1367
      %v1369 = vrot.slane %v1368, 2
      %v1370 = vadd.f32 %v1368, %v1369
      %v1371 = vrot.slane %v1370, 1
      %v1372 = vadd.f32 %v1370, %v1371
      %v1373 = vadd.f32 %v1361, %v1365
      %v1374 = vrot.slane %v1373, 4
      %v1375 = vadd.f32 %v1373, %v1374
      %v1376 = vrot.slane %v1375, 2
      %v1377 = vadd.f32 %v1375, %v1376
      %v1378 = vrot.slane %v1377, 1
      %v1379 = vadd.f32 %v1377, %v1378
      %v1380 = vrcp.pop %v1372
      %v1381 = vrcp.pop %v1379
      %v1382 = vmul.f32 %v1359, %v1380
      %v1383 = vmul.f32 %v1361, %v1381
      %v1384 = vmul.f32 %v1363, %v1380
      %v1385 = vmul.f32 %v1365, %v1381
      %v1390 = vrot.slane %v1383, 7
      %v1391 = vrot.slane %v1385, 7
      %v1392 = vsel %vm944, %v1382, %v1390
      %v1393 = vsel %vm946, %v1382, %v1390
      %v1394 = vrot.slane %v1393, 1
      %v1395 = vsel %vm949, %v1382, %v1390
      %v1396 = vrot.slane %v1395, 2
      %v1397 = vsel %vm952, %v1382, %v1390
      %v1398 = vrot.slane %v1397, 3
      %vm1399 = vcmask 1044484
      %v1400 = vsel %vm1399, %v1382, %v1390
      %v1401 = vrot.slane %v1400, 4
      %vm1402 = vcmask 1045509
      %v1403 = vsel %vm1402, %v1382, %v1390
      %v1404 = vrot.slane %v1403, 5
      %vm1405 = vcmask 1046534
      %v1406 = vsel %vm1405, %v1382, %v1390
      %v1407 = vrot.slane %v1406, 6
      %vm1408 = vcmask 1046528
      %v1409 = vsel %vm1408, %v1390, %v1382
      %v1410 = vrot.slane %v1409, 7
      %v1411 = vsel %vm944, %v1384, %v1391
      %v1412 = vsel %vm946, %v1384, %v1391
      %v1413 = vrot.slane %v1412, 1
      %v1414 = vsel %vm949, %v1384, %v1391
      %v1415 = vrot.slane %v1414, 2
      %v1416 = vsel %vm952, %v1384, %v1391
      %v1417 = vrot.slane %v1416, 3
      %v1418 = vsel %vm1399, %v1384, %v1391
      %v1419 = vrot.slane %v1418, 4
      %v1420 = vsel %vm1402, %v1384, %v1391
      %v1421 = vrot.slane %v1420, 5
      %v1422 = vsel %vm1405, %v1384, %v1391
      %v1423 = vrot.slane %v1422, 6
      %v1424 = vsel %vm1408, %v1391, %v1384
      %v1425 = vrot.slane %v1424, 7
      %v1426 = vperm.slane %v1392, 0
      %v1427 = vperm.slane %v1392, 1
      %v1428 = vperm.slane %v1394, 0
      %v1429 = vperm.slane %v1394, 1
      %v1430 = vperm.slane %v1396, 0
      %v1431 = vperm.slane %v1396, 1
      %v1432 = vperm.slane %v1398, 0
      %v1433 = vperm.slane %v1398, 1
      %v1434 = vperm.slane %v1401, 0
      %v1435 = vperm.slane %v1401, 1
      %v1436 = vperm.slane %v1404, 0
      %v1437 = vperm.slane %v1404, 1
      %v1438 = vperm.slane %v1407, 0
      %v1439 = vperm.slane %v1407, 1
      %v1440 = vperm.slane %v1410, 0
      %v1441 = vperm.slane %v1410, 1
      %v1442 = vperm.slane %v1411, 0
      %v1443 = vperm.slane %v1411, 1
      %v1444 = vperm.slane %v1413, 0
      %v1445 = vperm.slane %v1413, 1
      %v1446 = vperm.slane %v1415, 0
      %v1447 = vperm.slane %v1415, 1
      %v1448 = vperm.slane %v1417, 0
      %v1449 = vperm.slane %v1417, 1
      %v1450 = vperm.slane %v1419, 0
      %v1451 = vperm.slane %v1419, 1
      %v1452 = vperm.slane %v1421, 0
      %v1453 = vperm.slane %v1421, 1
      %v1454 = vperm.slane %v1423, 0
      %v1455 = vperm.slane %v1423, 1
      %v1456 = vperm.slane %v1425, 0
      %v1457 = vperm.slane %v1425, 1
      %v1490 = vmul.f32 %v1250, %v1426
      %v1491 = vmul.f32 %v1251, %v1427
      %v1492 = vmul.f32 %v1252, %v1428
      %v1493 = vmul.f32 %v1253, %v1429
      %v1494 = vmul.f32 %v1254, %v1430
      %v1495 = vmul.f32 %v1255, %v1431
      %v1496 = vmul.f32 %v1256, %v1432
      %v1497 = vmul.f32 %v1257, %v1433
      %v1498 = vmul.f32 %v1258, %v1434
      %v1499 = vmul.f32 %v1259, %v1435
      %v1500 = vmul.f32 %v1260, %v1436
      %v1501 = vmul.f32 %v1261, %v1437
      %v1502 = vmul.f32 %v1262, %v1438
      %v1503 = vmul.f32 %v1263, %v1439
      %v1504 = vmul.f32 %v1264, %v1440
      %v1505 = vmul.f32 %v1265, %v1441
      %v1506 = vmul.f32 %v1266, %v1442
      %v1507 = vmul.f32 %v1267, %v1443
      %v1508 = vmul.f32 %v1268, %v1444
      %v1509 = vmul.f32 %v1269, %v1445
      %v1510 = vmul.f32 %v1270, %v1446
      %v1511 = vmul.f32 %v1271, %v1447
      %v1512 = vmul.f32 %v1272, %v1448
      %v1513 = vmul.f32 %v1273, %v1449
      %v1514 = vmul.f32 %v1274, %v1450
      %v1515 = vmul.f32 %v1275, %v1451
      %v1516 = vmul.f32 %v1276, %v1452
      %v1517 = vmul.f32 %v1277, %v1453
      %v1518 = vmul.f32 %v1278, %v1454
      %v1519 = vmul.f32 %v1279, %v1455
      %v1520 = vmul.f32 %v1280, %v1456
      %v1521 = vmul.f32 %v1281, %v1457
      %v1522 = vadd.f32 %v1490, %v1492
      %v1523 = vadd.f32 %v1522, %v1494
      %v1524 = vadd.f32 %v1523, %v1496
      %v1525 = vadd.f32 %v1524, %v1498
      %v1526 = vadd.f32 %v1525, %v1500
      %v1527 = vadd.f32 %v1526, %v1502
      %v1528 = vadd.f32 %v1527, %v1504
      %v1529 = vadd.f32 %v1528, %v1506
      %v1530 = vadd.f32 %v1529, %v1508
      %v1531 = vadd.f32 %v1530, %v1510
      %v1532 = vadd.f32 %v1531, %v1512
      %v1533 = vadd.f32 %v1532, %v1514
      %v1534 = vadd.f32 %v1533, %v1516
      %v1535 = vadd.f32 %v1534, %v1518
      %v1536 = vadd.f32 %v1535, %v1520
      %v1537 = vadd.f32 %v1491, %v1493
      %v1538 = vadd.f32 %v1537, %v1495
      %v1539 = vadd.f32 %v1538, %v1497
      %v1540 = vadd.f32 %v1539, %v1499
      %v1541 = vadd.f32 %v1540, %v1501
      %v1542 = vadd.f32 %v1541, %v1503
      %v1543 = vadd.f32 %v1542, %v1505
      %v1544 = vadd.f32 %v1543, %v1507
      %v1545 = vadd.f32 %v1544, %v1509
      %v1546 = vadd.f32 %v1545, %v1511
      %v1547 = vadd.f32 %v1546, %v1513
      %v1548 = vadd.f32 %v1547, %v1515
      %v1549 = vadd.f32 %v1548, %v1517
      %v1550 = vadd.f32 %v1549, %v1519
      %v1551 = vadd.f32 %v1550, %v1521
      %v1552 = vld [vmem:[%s10] sm:$0xff]
      %v1554 = vsel %vm722, %v1552, 0
      %1556 = vmatpush.msra.mxu0 0.0
      %1557 = vmatpush.msra.mxu0 0.0
      %1558 = vmatpush.msra.mxu0 0.0
      %1559 = vmatpush.msra.mxu0 0.0
      %1560 = vmatpush.msra.mxu0 0.0
      %1561 = vmatpush.msra.mxu0 0.0
      %1562 = vmatpush.msra.mxu0 0.0
      %1563 = vmatpush.msra.mxu0 0.0
      %1564 = vmatpush.msra.mxu0 0.0
      %1565 = vmatpush.msra.mxu0 0.0
      %1566 = vmatpush.msra.mxu0 0.0
      %1567 = vmatpush.msra.mxu0 0.0
      %1568 = vmatpush.msra.mxu0 0.0
      %1569 = vmatpush.msra.mxu0 0.0
      %1570 = vmatpush.msra.mxu0 0.0
      %1571 = vmatpush.msra.mxu0 %v1536
      %1572 = vmatmul.f32.gmra.mxu0 %v1554
      %v1573 = vpop.f32.mrf.mxu0
      %v1574 = vadd.f32 0.0, %v1573
      %1575 = vdwg.mxu0
      %1576 = vmatpush.msra.mxu0 0.0
      %1577 = vmatpush.msra.mxu0 0.0
      %1578 = vmatpush.msra.mxu0 0.0
      %1579 = vmatpush.msra.mxu0 0.0
      %1580 = vmatpush.msra.mxu0 0.0
      %1581 = vmatpush.msra.mxu0 0.0
      %1582 = vmatpush.msra.mxu0 0.0
      %1583 = vmatpush.msra.mxu0 0.0
      %1584 = vmatpush.msra.mxu0 0.0
      %1585 = vmatpush.msra.mxu0 0.0
      %1586 = vmatpush.msra.mxu0 0.0
      %1587 = vmatpush.msra.mxu0 0.0
      %1588 = vmatpush.msra.mxu0 0.0
      %1589 = vmatpush.msra.mxu0 0.0
      %1590 = vmatpush.msra.mxu0 0.0
      %1591 = vmatpush.msra.mxu0 %v1551
      %1592 = vmatmul.f32.gmra.mxu0 %v1554
      %v1593 = vpop.f32.mrf.mxu0
      %v1594 = vadd.f32 0.0, %v1593
      %1595 = vdwg.mxu0
      %v1596 = vmul.f32 %v1574, %v718
      %v1597 = vmul.f32 %v1594, %v719
      %v1598 = vxor.u32 %v1029, 2147483648
      %v1599 = vxor.u32 %v1030, 2147483648
      %v1600 = vxor.u32 %v1596, 2147483648
      %v1601 = vxor.u32 %v1597, 2147483648
      %v1602 = vxor.u32 %v747, 2147483648
      %v1603 = vxor.u32 %v770, 2147483648
      %v1604 = vmul.f32 %v1598, 1.442695
      %v1605 = vpow.pop %v1604
      %v1606 = vmul.f32 %v1599, 1.442695
      %v1607 = vpow.pop %v1606
      %v1608 = vmul.f32 %v1600, 1.442695
      %v1609 = vpow.pop %v1608
      %v1610 = vmul.f32 %v1601, 1.442695
      %v1611 = vpow.pop %v1610
      %v1612 = vmul.f32 %v1602, 1.442695
      %v1613 = vpow.pop %v1612
      %v1614 = vmul.f32 %v1603, 1.442695
      %v1615 = vpow.pop %v1614
      %v1616 = vadd.f32 %v1605, 1.0
      %v1617 = vadd.f32 %v1607, 1.0
      %v1618 = vadd.f32 %v1609, 1.0
      %v1619 = vadd.f32 %v1611, 1.0
      %v1620 = vadd.f32 %v1613, 1.0
      %v1621 = vadd.f32 %v1615, 1.0
      %v1622 = vrcp.pop %v1616
      %v1623 = vmul.f32 %v1616, %v1622
      %v1624 = vsub.f32 1.0, %v1623
      %v1625 = vmul.f32 %v1622, %v1624
      %v1626 = vadd.f32 %v1622, %v1625
      %vm1627 = vweird.f32 %v1616
      %vm1628 = vweird.f32 %v1622
      %vm1629 = vmor %vm1627, %vm1628
      %v1630 = vsel %vm1629, %v1622, %v1626
      %v1631 = vand.u32 2147483647, %v1616
      %vm1632 = vcmp.eq.f32.partialorder %v1631, 8.507059e+37
      %v1633 = vand.u32 %v1616, 2147483648
      %v1634 = vor.u32 1.1754944e-38, %v1633
      %v1635 = vsel %vm1632, %v1634, %v1630
      %v1636 = vmul.f32 1.0, %v1635
      %v1637 = vrcp.pop %v1617
      %v1638 = vmul.f32 %v1617, %v1637
      %v1639 = vsub.f32 1.0, %v1638
      %v1640 = vmul.f32 %v1637, %v1639
      %v1641 = vadd.f32 %v1637, %v1640
      %vm1642 = vweird.f32 %v1617
      %vm1643 = vweird.f32 %v1637
      %vm1644 = vmor %vm1642, %vm1643
      %v1645 = vsel %vm1644, %v1637, %v1641
      %v1646 = vand.u32 2147483647, %v1617
      %vm1647 = vcmp.eq.f32.partialorder %v1646, 8.507059e+37
      %v1648 = vand.u32 %v1617, 2147483648
      %v1649 = vor.u32 1.1754944e-38, %v1648
      %v1650 = vsel %vm1647, %v1649, %v1645
      %v1651 = vmul.f32 1.0, %v1650
      %v1652 = vrcp.pop %v1618
      %v1653 = vmul.f32 %v1618, %v1652
      %v1654 = vsub.f32 1.0, %v1653
      %v1655 = vmul.f32 %v1652, %v1654
      %v1656 = vadd.f32 %v1652, %v1655
      %vm1657 = vweird.f32 %v1618
      %vm1658 = vweird.f32 %v1652
      %vm1659 = vmor %vm1657, %vm1658
      %v1660 = vsel %vm1659, %v1652, %v1656
      %v1661 = vand.u32 2147483647, %v1618
      %vm1662 = vcmp.eq.f32.partialorder %v1661, 8.507059e+37
      %v1663 = vand.u32 %v1618, 2147483648
      %v1664 = vor.u32 1.1754944e-38, %v1663
      %v1665 = vsel %vm1662, %v1664, %v1660
      %v1666 = vmul.f32 1.0, %v1665
      %v1667 = vrcp.pop %v1619
      %v1668 = vmul.f32 %v1619, %v1667
      %v1669 = vsub.f32 1.0, %v1668
      %v1670 = vmul.f32 %v1667, %v1669
      %v1671 = vadd.f32 %v1667, %v1670
      %vm1672 = vweird.f32 %v1619
      %vm1673 = vweird.f32 %v1667
      %vm1674 = vmor %vm1672, %vm1673
      %v1675 = vsel %vm1674, %v1667, %v1671
      %v1676 = vand.u32 2147483647, %v1619
      %vm1677 = vcmp.eq.f32.partialorder %v1676, 8.507059e+37
      %v1678 = vand.u32 %v1619, 2147483648
      %v1679 = vor.u32 1.1754944e-38, %v1678
      %v1680 = vsel %vm1677, %v1679, %v1675
      %v1681 = vmul.f32 1.0, %v1680
      %v1682 = vrcp.pop %v1620
      %v1683 = vmul.f32 %v1620, %v1682
      %v1684 = vsub.f32 1.0, %v1683
      %v1685 = vmul.f32 %v1682, %v1684
      %v1686 = vadd.f32 %v1682, %v1685
      %vm1687 = vweird.f32 %v1620
      %vm1688 = vweird.f32 %v1682
      %vm1689 = vmor %vm1687, %vm1688
      %v1690 = vsel %vm1689, %v1682, %v1686
      %v1691 = vand.u32 2147483647, %v1620
      %vm1692 = vcmp.eq.f32.partialorder %v1691, 8.507059e+37
      %v1693 = vand.u32 %v1620, 2147483648
      %v1694 = vor.u32 1.1754944e-38, %v1693
      %v1695 = vsel %vm1692, %v1694, %v1690
      %v1696 = vmul.f32 1.0, %v1695
      %v1697 = vrcp.pop %v1621
      %v1698 = vmul.f32 %v1621, %v1697
      %v1699 = vsub.f32 1.0, %v1698
      %v1700 = vmul.f32 %v1697, %v1699
      %v1701 = vadd.f32 %v1697, %v1700
      %vm1702 = vweird.f32 %v1621
      %vm1703 = vweird.f32 %v1697
      %vm1704 = vmor %vm1702, %vm1703
      %v1705 = vsel %vm1704, %v1697, %v1701
      %v1706 = vand.u32 2147483647, %v1621
      %vm1707 = vcmp.eq.f32.partialorder %v1706, 8.507059e+37
      %v1708 = vand.u32 %v1621, 2147483648
      %v1709 = vor.u32 1.1754944e-38, %v1708
      %v1710 = vsel %vm1707, %v1709, %v1705
      %v1711 = vmul.f32 1.0, %v1710
      %v1712 = vld [vmem:[%s11] sm:$0xf]
      %vm1713 = vcmask 195584
      %v1715 = vsel %vm1713, %v1712, 0
      %1717 = vmatpush.msra.mxu0 0.0
      %1718 = vmatpush.msra.mxu0 0.0
      %1719 = vmatpush.msra.mxu0 0.0
      %1720 = vmatpush.msra.mxu0 0.0
      %1721 = vmatpush.msra.mxu0 0.0
      %1722 = vmatpush.msra.mxu0 0.0
      %1723 = vmatpush.msra.mxu0 0.0
      %1724 = vmatpush.msra.mxu0 0.0
      %1725 = vmatpush.msra.mxu0 0.0
      %1726 = vmatpush.msra.mxu0 0.0
      %1727 = vmatpush.msra.mxu0 0.0
      %1728 = vmatpush.msra.mxu0 0.0
      %1729 = vmatpush.msra.mxu0 0.0
      %1730 = vmatpush.msra.mxu0 %v1696
      %1731 = vmatpush.msra.mxu0 %v1666
      %1732 = vmatpush.msra.mxu0 %v1636
      %1733 = vmatmul.f32.gmra.mxu0 %v1715
      %v1734 = vpop.f32.mrf.mxu0
      %v1735 = vadd.f32 0.0, %v1734
      %1736 = vdwg.mxu0
      %1737 = vmatpush.msra.mxu0 0.0
      %1738 = vmatpush.msra.mxu0 0.0
      %1739 = vmatpush.msra.mxu0 0.0
      %1740 = vmatpush.msra.mxu0 0.0
      %1741 = vmatpush.msra.mxu0 0.0
      %1742 = vmatpush.msra.mxu0 0.0
      %1743 = vmatpush.msra.mxu0 0.0
      %1744 = vmatpush.msra.mxu0 0.0
      %1745 = vmatpush.msra.mxu0 0.0
      %1746 = vmatpush.msra.mxu0 0.0
      %1747 = vmatpush.msra.mxu0 0.0
      %1748 = vmatpush.msra.mxu0 0.0
      %1749 = vmatpush.msra.mxu0 0.0
      %1750 = vmatpush.msra.mxu0 %v1711
      %1751 = vmatpush.msra.mxu0 %v1681
      %1752 = vmatpush.msra.mxu0 %v1651
      %1753 = vmatmul.f32.gmra.mxu0 %v1715
      %v1754 = vpop.f32.mrf.mxu0
      %v1755 = vadd.f32 0.0, %v1754
      %1756 = vdwg.mxu0
      %v1757 = vmax.f32 %v1735, 0.0
      %v1758 = vmax.f32 %v1755, 0.0
      %v1759 = vld [vmem:[%s12] sm:$0xf]
      %v1761 = vsel %vm571, %v1759, 0
      %v1764 = vsel %vm581, %v1757, 0
      %v1767 = vsel %vm581, %v1758, 0
      %1769 = vmatpush.msra.mxu0 0.0
      %1770 = vmatpush.msra.mxu0 0.0
      %1771 = vmatpush.msra.mxu0 0.0
      %1772 = vmatpush.msra.mxu0 0.0
      %1773 = vmatpush.msra.mxu0 0.0
      %1774 = vmatpush.msra.mxu0 0.0
      %1775 = vmatpush.msra.mxu0 0.0
      %1776 = vmatpush.msra.mxu0 0.0
      %1777 = vmatpush.msra.mxu0 0.0
      %1778 = vmatpush.msra.mxu0 0.0
      %1779 = vmatpush.msra.mxu0 0.0
      %1780 = vmatpush.msra.mxu0 0.0
      %1781 = vmatpush.msra.mxu0 0.0
      %1782 = vmatpush.msra.mxu0 0.0
      %1783 = vmatpush.msra.mxu0 0.0
      %1784 = vmatpush.msra.mxu0 %v1764
      %1785 = vmatmul.f32.gmra.mxu0 %v1761
      %v1786 = vpop.f32.mrf.mxu0
      %v1787 = vadd.f32 0.0, %v1786
      %1788 = vdwg.mxu0
      %1789 = vmatpush.msra.mxu0 0.0
      %1790 = vmatpush.msra.mxu0 0.0
      %1791 = vmatpush.msra.mxu0 0.0
      %1792 = vmatpush.msra.mxu0 0.0
      %1793 = vmatpush.msra.mxu0 0.0
      %1794 = vmatpush.msra.mxu0 0.0
      %1795 = vmatpush.msra.mxu0 0.0
      %1796 = vmatpush.msra.mxu0 0.0
      %1797 = vmatpush.msra.mxu0 0.0
      %1798 = vmatpush.msra.mxu0 0.0
      %1799 = vmatpush.msra.mxu0 0.0
      %1800 = vmatpush.msra.mxu0 0.0
      %1801 = vmatpush.msra.mxu0 0.0
      %1802 = vmatpush.msra.mxu0 0.0
      %1803 = vmatpush.msra.mxu0 0.0
      %1804 = vmatpush.msra.mxu0 %v1767
      %1805 = vmatmul.f32.gmra.mxu0 %v1761
      %v1806 = vpop.f32.mrf.mxu0
      %v1807 = vadd.f32 0.0, %v1806
      %1808 = vdwg.mxu0
      %v1811 = vrot.slane %v1807, 4
      %v1812 = vsel %vm581, %v1787, %v1811
      %1814 = vst [vmem:[%s550] sm:$0xff] %v1812
      %s1815 = smul.u32 2, %s29
      %p1816 = scmp.lt.s32.totalorder %s28, 1
      %s1817 = scalar_select %p1816, %s28, 1
      %p1818 = scmp.lt.s32.totalorder %s1815, 1
      %s1819 = scalar_select %p1818, %s1815, 1
      %s1820 = smul.addr %s1817, 2
      %s1821 = sadd.s32 %s1819, %s1820
      %s1822 = smul.addr %s1821, 4
      %s1823 = scalar_lea.vmem %s13, %s1822
      // Predicated region
      $region73: #{graph_reasoning_forward.1} parent=71 // pred_check
        %p1824 = pneg %p350
      $region74: #{graph_reasoning_forward.1} parent=71 // pred_check_branch
        %1826 = sbr.rel (%p1824) target = $region76
      $region75: #{graph_reasoning_forward.1} parent=71 // pred_region
        %s1827 = smul.u32 2, %s29
      $region76: #{graph_reasoning_forward.1} parent=71 // pred_fallthru
        _
    $region72: #{graph_reasoning_forward.1} parent=5 // pred_fallthru
      _
    %p1828 = scmp.le.s32.totalorder 2, %s19
    // Predicated region
    $region77: #{graph_reasoning_forward.1} parent=5 // pred_check
      %p1829 = pneg %p1828
    $region78: #{graph_reasoning_forward.1} parent=5 // pred_check_branch
      %1831 = sbr.rel (%p1829) target = $region80
    $region79: #{graph_reasoning_forward.1} parent=5 // pred_region
      %s1832 = ssub.s32 %s19, 2
      // Predicated region
      $region81: #{graph_reasoning_forward.1} parent=79 // pred_check
        %p1833 = pneg %p356
      $region82: #{graph_reasoning_forward.1} parent=79 // pred_check_branch
        %1835 = sbr.rel (%p1833) target = $region84
      $region83: #{graph_reasoning_forward.1} parent=79 // pred_region
        %s1836 = smul.u32 2, %s31
        %p1837 = scmp.lt.s32.totalorder %s30, 1
        %s1838 = scalar_select %p1837, %s30, 1
        %p1839 = scmp.lt.s32.totalorder %s1836, 1
        %s1840 = scalar_select %p1839, %s1836, 1
        %s1841 = smul.addr %s1838, 2
        %s1842 = sadd.s32 %s1840, %s1841
        %s1843 = smul.addr %s1842, 4
        %s1844 = scalar_lea.vmem %s13, %s1843
      $region84: #{graph_reasoning_forward.1} parent=79 // pred_fallthru
        _
    $region80: #{graph_reasoning_forward.1} parent=5 // pred_fallthru
      _
  $region6: #{graph_reasoning_forward.1} parent=0 // loop_footer
    %s23 = sadd.s32 1, %s19
  $region7: #{graph_reasoning_forward.1} parent=0 // loop_footer_branch
    %18 = sbr.rel target = $region3
  $region8: #{graph_reasoning_forward.1} parent=0 // loop_exit
    _

</llo_original>
